<compile_context>
chip_gen: v7x
topology: tpu7x:2x2x1
jax: 0.10.0
libtpu: 0.0.40
codegen_flags: <defaults>
</compile_context>

<pallas_src>
import math
import functools

import numpy as np
import jax
import jax.numpy as jnp
from jax import lax
from jax.experimental import pallas as pl
from jax.experimental.pallas import tpu as pltpu


# ----------------------------------------------------------------------------
# Irreps / instruction metadata (mirrors DepthwiseTensorProductModule.__init__)
# ----------------------------------------------------------------------------
# (mul, l, parity)
IRREPS_IN1 = [(8, 0, +1), (8, 1, -1), (8, 2, +1)]     # irreps_out == irreps_in1
IRREPS_IN2 = [(1, 0, +1), (1, 1, -1), (1, 2, +1)]     # contains Irrep('0e') as required
INTERNAL_WEIGHTS = False                              # weights provided per edge
MUL = 8                                               # common multiplicity of irreps_in1


def _irreps_dim(irreps):
    return sum(mul * (2 * l + 1) for (mul, l, _p) in irreps)


def _irreps_offsets(irreps):
    offs, off = [], 0
    for (mul, l, _p) in irreps:
        offs.append(off)
        off += mul * (2 * l + 1)
    return offs


D1 = _irreps_dim(IRREPS_IN1)      # 72
D2 = _irreps_dim(IRREPS_IN2)      # 9
OFF1 = _irreps_offsets(IRREPS_IN1)
OFF2 = _irreps_offsets(IRREPS_IN2)

# instructions = [(i_out, i_2, i_out, 'uvu', True) ... if ir_out in ir_out * ir_2]
# NOTE: the parity rule discards every path through the 1o block of irreps_in2,
# so 3 of the 9 x_2 columns are dead data by construction (kept for layout parity
# with the module's input signature).
INSTRUCTIONS = []
for _i_out, (_mo, _lo, _po) in enumerate(IRREPS_IN1):
    for _i_2, (_m2, _l2, _p2) in enumerate(IRREPS_IN2):
        if _po * _p2 == _po and abs(_lo - _l2) <= _lo <= _lo + _l2:
            INSTRUCTIONS.append((_i_out, _i_2))

# e3nn weight layout: per-instruction 'uvu' weights of shape (mul1, mul2=1), concatenated
W_OFFS, _w = [], 0
for (_i_out, _i_2) in INSTRUCTIONS:
    W_OFFS.append(_w)
    _w += IRREPS_IN1[_i_out][0] * IRREPS_IN2[_i_2][0]
WEIGHT_NUMEL = _w                 # 40

# fan_in per output slice (for rescale=True)
FAN_IN = {i: 0 for i in range(len(IRREPS_IN1))}
for (_i_out, _i_2) in INSTRUCTIONS:
    FAN_IN[_i_out] += IRREPS_IN2[_i_2][0]

# Packed-operand row layout (single kernel input, shape (D_PACK, E)):
#   rows [0, D1)                      : x1, component-major ([m, u])
#   rows [D1, D1+WEIGHT_NUMEL)        : weight (u)           (8-aligned slices)
#   rows [D1+WEIGHT_NUMEL, D_PACK)    : x2 components
W_ROW0 = D1                           # 72
X2_ROW0 = D1 + WEIGHT_NUMEL           # 112
D_PACK = D1 + WEIGHT_NUMEL + D2       # 121


# ----------------------------------------------------------------------------
# Real-basis Wigner-3j coefficients (e3nn-style construction, computed in-script)
# ----------------------------------------------------------------------------
def _su2_cg(j1, m1, j2, m2, j3, m3):
    """Condon-Shortley Clebsch-Gordan <j1 m1 j2 m2 | j3 m3> (integer j)."""
    if m1 + m2 != m3 or not (abs(j1 - j2) <= j3 <= j1 + j2):
        return 0.0
    f = math.factorial
    pref = ((2 * j3 + 1) * f(j3 + j1 - j2) * f(j3 - j1 + j2) * f(j1 + j2 - j3)
            / f(j1 + j2 + j3 + 1)) ** 0.5
    pref *= (f(j3 + m3) * f(j3 - m3) * f(j1 - m1) * f(j1 + m1)
             * f(j2 - m2) * f(j2 + m2)) ** 0.5
    kmin = max(0, j2 - j3 - m1, j1 - j3 + m2)
    kmax = min(j1 + j2 - j3, j1 - m1, j2 + m2)
    s = 0.0
    for k in range(kmin, kmax + 1):
        s += (-1) ** k / (f(k) * f(j1 + j2 - j3 - k) * f(j1 - m1 - k)
                          * f(j2 + m2 - k) * f(j3 - j2 + m1 + k) * f(j3 - j1 - m2 + k))
    return pref * s


def _q_real_to_complex(l):
    q = np.zeros((2 * l + 1, 2 * l + 1), dtype=np.complex128)
    for m in range(-l, 0):
        q[l + m, l + abs(m)] = 1.0 / math.sqrt(2)
        q[l + m, l - abs(m)] = -1j / math.sqrt(2)
    q[l, l] = 1.0
    for m in range(1, l + 1):
        q[l + m, l + abs(m)] = (-1) ** m / math.sqrt(2)
        q[l + m, l - abs(m)] = 1j * (-1) ** m / math.sqrt(2)
    return ((-1j) ** l) * q


def real_wigner_3j(l1, l2, l3):
    """Unit-Frobenius-norm invariant 3-tensor in the real spherical-harmonic basis."""
    K = np.zeros((2 * l1 + 1, 2 * l2 + 1, 2 * l3 + 1))
    for m1 in range(-l1, l1 + 1):
        for m2 in range(-l2, l2 + 1):
            for m3 in range(-l3, l3 + 1):
                K[l1 + m1, l2 + m2, l3 + m3] = _su2_cg(l1, m1, l2, m2, l3, m3)
    Q1, Q2, Q3 = _q_real_to_complex(l1), _q_real_to_complex(l2), _q_real_to_complex(l3)
    C = np.einsum('ia,jb,kc,ijk->abc', Q1, Q2, np.conj(Q3), K)
    Cr, Ci = np.real(C), np.imag(C)
    C = Cr if np.linalg.norm(Cr) >= np.linalg.norm(Ci) else Ci
    return C / np.linalg.norm(C)


# per-instruction effective coupling  alpha * w3j(l_out, l_2, l_out),
# alpha = sqrt(2*l_out + 1)  (irrep_normalization='component', path_normalization='none')
INSTR_C = []
for (_i_out, _i_2) in INSTRUCTIONS:
    _lo = IRREPS_IN1[_i_out][1]
    _l2 = IRREPS_IN2[_i_2][1]
    INSTR_C.append(real_wigner_3j(_lo, _l2, _lo) * math.sqrt(2 * _lo + 1))

_NNZ_TRIPLES = sum(int(np.sum(np.abs(C) > 1e-12)) for C in INSTR_C)
_NNZ_PAIRS = sum(int(np.sum(np.any(np.abs(C) > 1e-12, axis=-1))) for C in INSTR_C)


# ----------------------------------------------------------------------------
# Pallas kernel (features on sublanes, edges on lanes)
# ----------------------------------------------------------------------------
TE_MAX = 2048   # edges per grid step (lane axis of the block); ~3.2 MB VMEM dbl-buffered
LC = 256        # edges per inner register-chunk (bounds vreg live ranges)


def _make_dtp_kernel(te):
    """Kernel over one (D_PACK, te) packed input block -> (D1, te) output block."""
    nc = te // LC

    def kernel(x_ref, o_ref):
        f32 = jnp.float32

        def chunk(j, carry):
            col = pl.multiple_of(j * LC, LC)
            cs = pl.ds(col, LC)

            for i_out, (mul, l_o, _p) in enumerate(IRREPS_IN1):
                d_o = 2 * l_o + 1
                base1 = OFF1[i_out]
                # x1 component slices: each (MUL, LC), 8-sublane-aligned full-width tiles
                x1c = [x_ref[pl.ds(base1 + m * MUL, MUL), cs].astype(f32)
                       for m in range(d_o)]
                acc = [None] * d_o

                for instr_idx, (io, i_2) in enumerate(INSTRUCTIONS):
                    if io != i_out:
                        continue
                    d_2 = 2 * IRREPS_IN2[i_2][1] + 1
                    C = INSTR_C[instr_idx]
                    wp = x_ref[pl.ds(W_ROW0 + W_OFFS[instr_idx], MUL), cs].astype(f32)

                    # hoist x2 sublane-broadcasts (only components with nonzero coupling)
                    x2b = {}
                    for m2 in range(d_2):
                        if not np.any(np.abs(C[:, m2, :]) > 1e-12):
                            continue
                        row = X2_ROW0 + OFF2[i_2] + m2
                        x2b[m2] = jnp.broadcast_to(
                            x_ref[pl.ds(row, 1), cs].astype(f32), (MUL, LC))

                    # hoist x1*x2 products over the output component index k
                    s = [None] * d_o
                    for m1 in range(d_o):
                        for m2 in range(d_2):
                            if not np.any(np.abs(C[m1, m2, :]) > 1e-12):
                                continue
                            p = x1c[m1] * x2b[m2]
                            for k in range(d_o):
                                c = float(C[m1, m2, k])
                                if abs(c) < 1e-12:
                                    continue
                                t = c * p
                                s[k] = t if s[k] is None else s[k] + t

                    for k in range(d_o):
                        if s[k] is None:
                            continue
                        contrib = wp * s[k]
                        acc[k] = contrib if acc[k] is None else acc[k] + contrib

                # direct lane-dense stores of each component slice (unmasked vst)
                for k in range(d_o):
                    v = acc[k] if acc[k] is not None else jnp.zeros((MUL, LC), f32)
                    o_ref[pl.ds(base1 + k * MUL, MUL), cs] = v.astype(o_ref.dtype)
            return carry

        lax.fori_loop(0, nc, chunk, 0, unroll=True)

    return kernel


# ----------------------------------------------------------------------------
# JAX glue: pack to (feature, edge) layout, pallas_call, unpack
# ----------------------------------------------------------------------------
def _round_up(x, m):
    return ((x + m - 1) // m) * m


def _pack_inputs(x_1, x_2, weight, e_pad):
    """Build the single (D_PACK, e_pad) operand: x1 component-major | weight | x2."""
    dt = x_1.dtype
    E = x_1.shape[0]
    parts = []
    off = 0
    for (mul, l, _p) in IRREPS_IN1:
        d = 2 * l + 1
        sl = x_1[:, off: off + mul * d].reshape(E, mul, d)          # [e, u, m]
        parts.append(jnp.transpose(sl, (2, 1, 0)).reshape(d * mul, E))  # row = m*mul + u
        off += mul * d
    parts.append(weight.astype(dt).T)                               # (W, E)
    parts.append(x_2.astype(dt).T)                                  # (D2, E)
    packed = jnp.concatenate(parts, axis=0)
    if e_pad != E:
        packed = jnp.pad(packed, ((0, 0), (0, e_pad - E)))
    return packed


def _unpack_output(outm, E):
    """(D1, e_pad) component-major transposed -> (E, D1) e3nn layout."""
    parts = []
    for i, (mul, l, _p) in enumerate(IRREPS_IN1):
        d = 2 * l + 1
        base = OFF1[i]
        sl = outm[base: base + d * mul, :E].reshape(d, mul, E)      # [m, u, e]
        parts.append(jnp.transpose(sl, (2, 1, 0)).reshape(E, mul * d))
    return jnp.concatenate(parts, axis=-1)


@jax.jit
def depthwise_tensor_product(x_1, x_2, weight):
    """forward(x_1, x_2, weight): irreps_in1 x irreps_in2 --> irreps_out = irreps_in1."""
    # TODO(synk): for end-to-end Equiformer use, keep the packed (feature, edge)
    # layout persistent between layers so these reorder passes are not paid per call.
    E = x_1.shape[0]
    te = min(TE_MAX, _round_up(max(E, 1), 512))      # lane tile: multiple of 128 and LC
    e_pad = _round_up(max(E, 1), te)
    packed = _pack_inputs(x_1, x_2, weight, e_pad)

    itemsize = packed.dtype.itemsize
    cost = pl.CostEstimate(
        flops=int(e_pad) * MUL * (2 * _NNZ_TRIPLES + _NNZ_PAIRS + 2 * len(INSTRUCTIONS)),
        transcendentals=0,
        bytes_accessed=int(e_pad) * (D_PACK + D1) * itemsize,
    )

    outm = pl.pallas_call(
        _make_dtp_kernel(te),
        out_shape=jax.ShapeDtypeStruct((D1, e_pad), x_1.dtype),
        grid_spec=pltpu.PrefetchScalarGridSpec(
            num_scalar_prefetch=0,
            grid=(e_pad // te,),
            in_specs=[pl.BlockSpec((D_PACK, te), lambda i: (0, i))],
            out_specs=pl.BlockSpec((D1, te), lambda i: (0, i)),
        ),
        compiler_params=pltpu.CompilerParams(dimension_semantics=("parallel",)),
        cost_estimate=cost,
    )(packed)
    return _unpack_output(outm, E)


# ----------------------------------------------------------------------------
# Pure-numpy reference (e3nn layout) for validation
# ----------------------------------------------------------------------------
def reference_forward(x_1, x_2, weight):
    x1 = np.asarray(x_1, np.float64)
    x2 = np.asarray(x_2, np.float64)
    w = np.asarray(weight, np.float64)
    E = x1.shape[0]
    out = np.zeros((E, D1), np.float64)
    for instr_idx, (i_out, i_2) in enumerate(INSTRUCTIONS):
        mul, l_o, _ = IRREPS_IN1[i_out]
        d_o = 2 * l_o + 1
        d_2 = 2 * IRREPS_IN2[i_2][1] + 1
        x1s = x1[:, OFF1[i_out]: OFF1[i_out] + mul * d_o].reshape(E, mul, d_o)
        x2s = x2[:, OFF2[i_2]: OFF2[i_2] + d_2]
        wp = w[:, W_OFFS[instr_idx]: W_OFFS[instr_idx] + mul]
        C = INSTR_C[instr_idx]
        contrib = np.einsum('eui,ijk,ej,eu->euk', x1s, C, x2s, wp)
        out[:, OFF1[i_out]: OFF1[i_out] + mul * d_o] += contrib.reshape(E, mul * d_o)
    return out


if __name__ == "__main__":
    E = 384   # deliberately not a multiple of the lane tile -> exercises padding path
    key = jax.random.PRNGKey(0)
    k1, k2, k3 = jax.random.split(key, 3)
    x_1 = jax.random.normal(k1, (E, D1), dtype=jnp.float32)
    x_2 = jax.random.normal(k2, (E, D2), dtype=jnp.float32)

    # internal_weights=False -> per-edge weights (shared_weights=False).
    # rescale=True: scale each instruction's weights by 1/sqrt(fan_in(out slice)),
    # mirroring where Equiformer's TensorProductRescale applies sqrt_k at init.
    w_np = np.array(jax.random.normal(k3, (E, WEIGHT_NUMEL), dtype=jnp.float32))
    for instr_idx, (i_out, i_2) in enumerate(INSTRUCTIONS):
        mul = IRREPS_IN1[i_out][0]
        w_np[:, W_OFFS[instr_idx]: W_OFFS[instr_idx] + mul] *= 1.0 / math.sqrt(FAN_IN[i_out])
    weight = jnp.asarray(w_np, dtype=jnp.float32)

    out = depthwise_tensor_product(x_1, x_2, weight)
    out = jax.block_until_ready(out)

    ref = reference_forward(x_1, x_2, weight)
    np.testing.assert_allclose(np.asarray(out), ref, rtol=1e-4, atol=1e-4)
    # TODO(synk): e3nn's exact per-irrep sign convention of wigner_3j is reproduced
    # from its published construction (Racah CG + real-basis change); a residual
    # per-path global sign would be absorbed by the synthetic weights.
    print("KERNEL_OK")
</pallas_src>

<mosaic_0001>
module attributes {stable_mosaic.version = 11 : i64} {
  func.func @kernel(%arg0: i32, %arg1: memref<121x512xf32, #tpu.memory_space<vmem>>, %arg2: memref<72x512xf32, #tpu.memory_space<vmem>>) attributes {dimension_semantics = [#tpu.dimension_semantics<parallel>], iteration_bounds = array<i64: 1>, scalar_prefetch = 0 : i64, scratch_operands = 0 : i64, tpu.core_type = #tpu.core_type<tc>, window_params = [{transform_indices = @transform_0, window_bounds = array<i64: 121, 512>}, {transform_indices = @transform_1, window_bounds = array<i64: 72, 512>}]} {
    %c0_i32 = arith.constant 0 : i32
    %c256_i32 = arith.constant 256 : i32
    %0 = arith.muli %c0_i32, %c256_i32 : i32
    %1 = tpu.assume_multiple %0, 256 : i32
    %c0 = arith.constant 0 : index
    %2 = arith.index_cast %1 : i32 to index
    %3 = vector.load %arg1[%c0, %2] : memref<121x512xf32, #tpu.memory_space<vmem>>, vector<8x256xf32>
    %c72 = arith.constant 72 : index
    %4 = arith.index_cast %1 : i32 to index
    %5 = vector.load %arg1[%c72, %4] : memref<121x512xf32, #tpu.memory_space<vmem>>, vector<8x256xf32>
    %c112 = arith.constant 112 : index
    %6 = arith.index_cast %1 : i32 to index
    %7 = vector.load %arg1[%c112, %6] : memref<121x512xf32, #tpu.memory_space<vmem>>, vector<1x256xf32>
    %8 = vector.shape_cast %7 : vector<1x256xf32> to vector<1x256xf32>
    %9 = vector.broadcast %8 : vector<1x256xf32> to vector<8x256xf32>
    %10 = arith.mulf %3, %9 : vector<8x256xf32>
    %cst = arith.constant 1.000000e+00 : f32
    %11 = vector.broadcast %cst : f32 to vector<8x256xf32>
    %12 = arith.mulf %11, %10 : vector<8x256xf32>
    %13 = arith.mulf %5, %12 : vector<8x256xf32>
    %c0_0 = arith.constant 0 : index
    %14 = arith.index_cast %1 : i32 to index
    %15 = vector.load %arg2[%c0_0, %14] : memref<72x512xf32, #tpu.memory_space<vmem>>, vector<8x256xf32>
    tpu.vector_store %arg2[%c0_0, %14], %13 {strides = array<i32>} : memref<72x512xf32, #tpu.memory_space<vmem>>, vector<8x256xf32>,
    %c8 = arith.constant 8 : index
    %16 = arith.index_cast %1 : i32 to index
    %17 = vector.load %arg1[%c8, %16] : memref<121x512xf32, #tpu.memory_space<vmem>>, vector<8x256xf32>
    %c16 = arith.constant 16 : index
    %18 = arith.index_cast %1 : i32 to index
    %19 = vector.load %arg1[%c16, %18] : memref<121x512xf32, #tpu.memory_space<vmem>>, vector<8x256xf32>
    %c24 = arith.constant 24 : index
    %20 = arith.index_cast %1 : i32 to index
    %21 = vector.load %arg1[%c24, %20] : memref<121x512xf32, #tpu.memory_space<vmem>>, vector<8x256xf32>
    %c80 = arith.constant 80 : index
    %22 = arith.index_cast %1 : i32 to index
    %23 = vector.load %arg1[%c80, %22] : memref<121x512xf32, #tpu.memory_space<vmem>>, vector<8x256xf32>
    %c112_1 = arith.constant 112 : index
    %24 = arith.index_cast %1 : i32 to index
    %25 = vector.load %arg1[%c112_1, %24] : memref<121x512xf32, #tpu.memory_space<vmem>>, vector<1x256xf32>
    %26 = vector.shape_cast %25 : vector<1x256xf32> to vector<1x256xf32>
    %27 = vector.broadcast %26 : vector<1x256xf32> to vector<8x256xf32>
    %28 = arith.mulf %17, %27 : vector<8x256xf32>
    %cst_2 = arith.constant 1.000000e+00 : f32
    %29 = vector.broadcast %cst_2 : f32 to vector<8x256xf32>
    %30 = arith.mulf %29, %28 : vector<8x256xf32>
    %31 = arith.mulf %19, %27 : vector<8x256xf32>
    %cst_3 = arith.constant 1.000000e+00 : f32
    %32 = vector.broadcast %cst_3 : f32 to vector<8x256xf32>
    %33 = arith.mulf %32, %31 : vector<8x256xf32>
    %34 = arith.mulf %21, %27 : vector<8x256xf32>
    %cst_4 = arith.constant 1.000000e+00 : f32
    %35 = vector.broadcast %cst_4 : f32 to vector<8x256xf32>
    %36 = arith.mulf %35, %34 : vector<8x256xf32>
    %37 = arith.mulf %23, %30 : vector<8x256xf32>
    %38 = arith.mulf %23, %33 : vector<8x256xf32>
    %39 = arith.mulf %23, %36 : vector<8x256xf32>
    %c88 = arith.constant 88 : index
    %40 = arith.index_cast %1 : i32 to index
    %41 = vector.load %arg1[%c88, %40] : memref<121x512xf32, #tpu.memory_space<vmem>>, vector<8x256xf32>
    %c116 = arith.constant 116 : index
    %42 = arith.index_cast %1 : i32 to index
    %43 = vector.load %arg1[%c116, %42] : memref<121x512xf32, #tpu.memory_space<vmem>>, vector<1x256xf32>
    %44 = vector.shape_cast %43 : vector<1x256xf32> to vector<1x256xf32>
    %45 = vector.broadcast %44 : vector<1x256xf32> to vector<8x256xf32>
    %c117 = arith.constant 117 : index
    %46 = arith.index_cast %1 : i32 to index
    %47 = vector.load %arg1[%c117, %46] : memref<121x512xf32, #tpu.memory_space<vmem>>, vector<1x256xf32>
    %48 = vector.shape_cast %47 : vector<1x256xf32> to vector<1x256xf32>
    %49 = vector.broadcast %48 : vector<1x256xf32> to vector<8x256xf32>
    %c118 = arith.constant 118 : index
    %50 = arith.index_cast %1 : i32 to index
    %51 = vector.load %arg1[%c118, %50] : memref<121x512xf32, #tpu.memory_space<vmem>>, vector<1x256xf32>
    %52 = vector.shape_cast %51 : vector<1x256xf32> to vector<1x256xf32>
    %53 = vector.broadcast %52 : vector<1x256xf32> to vector<8x256xf32>
    %c119 = arith.constant 119 : index
    %54 = arith.index_cast %1 : i32 to index
    %55 = vector.load %arg1[%c119, %54] : memref<121x512xf32, #tpu.memory_space<vmem>>, vector<1x256xf32>
    %56 = vector.shape_cast %55 : vector<1x256xf32> to vector<1x256xf32>
    %57 = vector.broadcast %56 : vector<1x256xf32> to vector<8x256xf32>
    %c120 = arith.constant 120 : index
    %58 = arith.index_cast %1 : i32 to index
    %59 = vector.load %arg1[%c120, %58] : memref<121x512xf32, #tpu.memory_space<vmem>>, vector<1x256xf32>
    %60 = vector.shape_cast %59 : vector<1x256xf32> to vector<1x256xf32>
    %61 = vector.broadcast %60 : vector<1x256xf32> to vector<8x256xf32>
    %62 = arith.mulf %17, %45 : vector<8x256xf32>
    %cst_5 = arith.constant 0.547722578 : f32
    %63 = vector.broadcast %cst_5 : f32 to vector<8x256xf32>
    %64 = arith.mulf %63, %62 : vector<8x256xf32>
    %65 = arith.mulf %17, %49 : vector<8x256xf32>
    %cst_6 = arith.constant 0.547722578 : f32
    %66 = vector.broadcast %cst_6 : f32 to vector<8x256xf32>
    %67 = arith.mulf %66, %65 : vector<8x256xf32>
    %68 = arith.mulf %17, %53 : vector<8x256xf32>
    %cst_7 = arith.constant -0.316227764 : f32
    %69 = vector.broadcast %cst_7 : f32 to vector<8x256xf32>
    %70 = arith.mulf %69, %68 : vector<8x256xf32>
    %71 = arith.mulf %17, %61 : vector<8x256xf32>
    %cst_8 = arith.constant -0.547722578 : f32
    %72 = vector.broadcast %cst_8 : f32 to vector<8x256xf32>
    %73 = arith.mulf %72, %71 : vector<8x256xf32>
    %74 = arith.addf %70, %73 : vector<8x256xf32>
    %75 = arith.mulf %19, %49 : vector<8x256xf32>
    %cst_9 = arith.constant 0.547722578 : f32
    %76 = vector.broadcast %cst_9 : f32 to vector<8x256xf32>
    %77 = arith.mulf %76, %75 : vector<8x256xf32>
    %78 = arith.addf %74, %77 : vector<8x256xf32>
    %79 = arith.mulf %19, %53 : vector<8x256xf32>
    %cst_10 = arith.constant 0.632455527 : f32
    %80 = vector.broadcast %cst_10 : f32 to vector<8x256xf32>
    %81 = arith.mulf %80, %79 : vector<8x256xf32>
    %82 = arith.addf %67, %81 : vector<8x256xf32>
    %83 = arith.mulf %19, %57 : vector<8x256xf32>
    %cst_11 = arith.constant 0.547722578 : f32
    %84 = vector.broadcast %cst_11 : f32 to vector<8x256xf32>
    %85 = arith.mulf %84, %83 : vector<8x256xf32>
    %86 = arith.addf %64, %85 : vector<8x256xf32>
    %87 = arith.mulf %21, %45 : vector<8x256xf32>
    %cst_12 = arith.constant 0.547722578 : f32
    %88 = vector.broadcast %cst_12 : f32 to vector<8x256xf32>
    %89 = arith.mulf %88, %87 : vector<8x256xf32>
    %90 = arith.addf %78, %89 : vector<8x256xf32>
    %91 = arith.mulf %21, %53 : vector<8x256xf32>
    %cst_13 = arith.constant -0.316227764 : f32
    %92 = vector.broadcast %cst_13 : f32 to vector<8x256xf32>
    %93 = arith.mulf %92, %91 : vector<8x256xf32>
    %94 = arith.addf %86, %93 : vector<8x256xf32>
    %95 = arith.mulf %21, %57 : vector<8x256xf32>
    %cst_14 = arith.constant 0.547722578 : f32
    %96 = vector.broadcast %cst_14 : f32 to vector<8x256xf32>
    %97 = arith.mulf %96, %95 : vector<8x256xf32>
    %98 = arith.addf %82, %97 : vector<8x256xf32>
    %99 = arith.mulf %21, %61 : vector<8x256xf32>
    %cst_15 = arith.constant 0.547722578 : f32
    %100 = vector.broadcast %cst_15 : f32 to vector<8x256xf32>
    %101 = arith.mulf %100, %99 : vector<8x256xf32>
    %102 = arith.addf %94, %101 : vector<8x256xf32>
    %103 = arith.mulf %41, %90 : vector<8x256xf32>
    %104 = arith.addf %37, %103 : vector<8x256xf32>
    %105 = arith.mulf %41, %98 : vector<8x256xf32>
    %106 = arith.addf %38, %105 : vector<8x256xf32>
    %107 = arith.mulf %41, %102 : vector<8x256xf32>
    %108 = arith.addf %39, %107 : vector<8x256xf32>
    %c8_16 = arith.constant 8 : index
    %109 = arith.index_cast %1 : i32 to index
    %110 = vector.load %arg2[%c8_16, %109] : memref<72x512xf32, #tpu.memory_space<vmem>>, vector<8x256xf32>
    tpu.vector_store %arg2[%c8_16, %109], %104 {strides = array<i32>} : memref<72x512xf32, #tpu.memory_space<vmem>>, vector<8x256xf32>,
    %c16_17 = arith.constant 16 : index
    %111 = arith.index_cast %1 : i32 to index
    %112 = vector.load %arg2[%c16_17, %111] : memref<72x512xf32, #tpu.memory_space<vmem>>, vector<8x256xf32>
    tpu.vector_store %arg2[%c16_17, %111], %106 {strides = array<i32>} : memref<72x512xf32, #tpu.memory_space<vmem>>, vector<8x256xf32>,
    %c24_18 = arith.constant 24 : index
    %113 = arith.index_cast %1 : i32 to index
    %114 = vector.load %arg2[%c24_18, %113] : memref<72x512xf32, #tpu.memory_space<vmem>>, vector<8x256xf32>
    tpu.vector_store %arg2[%c24_18, %113], %108 {strides = array<i32>} : memref<72x512xf32, #tpu.memory_space<vmem>>, vector<8x256xf32>,
    %c32 = arith.constant 32 : index
    %115 = arith.index_cast %1 : i32 to index
    %116 = vector.load %arg1[%c32, %115] : memref<121x512xf32, #tpu.memory_space<vmem>>, vector<8x256xf32>
    %c40 = arith.constant 40 : index
    %117 = arith.index_cast %1 : i32 to index
    %118 = vector.load %arg1[%c40, %117] : memref<121x512xf32, #tpu.memory_space<vmem>>, vector<8x256xf32>
    %c48 = arith.constant 48 : index
    %119 = arith.index_cast %1 : i32 to index
    %120 = vector.load %arg1[%c48, %119] : memref<121x512xf32, #tpu.memory_space<vmem>>, vector<8x256xf32>
    %c56 = arith.constant 56 : index
    %121 = arith.index_cast %1 : i32 to index
    %122 = vector.load %arg1[%c56, %121] : memref<121x512xf32, #tpu.memory_space<vmem>>, vector<8x256xf32>
    %c64 = arith.constant 64 : index
    %123 = arith.index_cast %1 : i32 to index
    %124 = vector.load %arg1[%c64, %123] : memref<121x512xf32, #tpu.memory_space<vmem>>, vector<8x256xf32>
    %c96 = arith.constant 96 : index
    %125 = arith.index_cast %1 : i32 to index
    %126 = vector.load %arg1[%c96, %125] : memref<121x512xf32, #tpu.memory_space<vmem>>, vector<8x256xf32>
    %c112_19 = arith.constant 112 : index
    %127 = arith.index_cast %1 : i32 to index
    %128 = vector.load %arg1[%c112_19, %127] : memref<121x512xf32, #tpu.memory_space<vmem>>, vector<1x256xf32>
    %129 = vector.shape_cast %128 : vector<1x256xf32> to vector<1x256xf32>
    %130 = vector.broadcast %129 : vector<1x256xf32> to vector<8x256xf32>
    %131 = arith.mulf %116, %130 : vector<8x256xf32>
    %cst_20 = arith.constant 1.000000e+00 : f32
    %132 = vector.broadcast %cst_20 : f32 to vector<8x256xf32>
    %133 = arith.mulf %132, %131 : vector<8x256xf32>
    %134 = arith.mulf %118, %130 : vector<8x256xf32>
    %cst_21 = arith.constant 1.000000e+00 : f32
    %135 = vector.broadcast %cst_21 : f32 to vector<8x256xf32>
    %136 = arith.mulf %135, %134 : vector<8x256xf32>
    %137 = arith.mulf %120, %130 : vector<8x256xf32>
    %cst_22 = arith.constant 1.000000e+00 : f32
    %138 = vector.broadcast %cst_22 : f32 to vector<8x256xf32>
    %139 = arith.mulf %138, %137 : vector<8x256xf32>
    %140 = arith.mulf %122, %130 : vector<8x256xf32>
    %cst_23 = arith.constant 1.000000e+00 : f32
    %141 = vector.broadcast %cst_23 : f32 to vector<8x256xf32>
    %142 = arith.mulf %141, %140 : vector<8x256xf32>
    %143 = arith.mulf %124, %130 : vector<8x256xf32>
    %cst_24 = arith.constant 1.000000e+00 : f32
    %144 = vector.broadcast %cst_24 : f32 to vector<8x256xf32>
    %145 = arith.mulf %144, %143 : vector<8x256xf32>
    %146 = arith.mulf %126, %133 : vector<8x256xf32>
    %147 = arith.mulf %126, %136 : vector<8x256xf32>
    %148 = arith.mulf %126, %139 : vector<8x256xf32>
    %149 = arith.mulf %126, %142 : vector<8x256xf32>
    %150 = arith.mulf %126, %145 : vector<8x256xf32>
    %c104 = arith.constant 104 : index
    %151 = arith.index_cast %1 : i32 to index
    %152 = vector.load %arg1[%c104, %151] : memref<121x512xf32, #tpu.memory_space<vmem>>, vector<8x256xf32>
    %c116_25 = arith.constant 116 : index
    %153 = arith.index_cast %1 : i32 to index
    %154 = vector.load %arg1[%c116_25, %153] : memref<121x512xf32, #tpu.memory_space<vmem>>, vector<1x256xf32>
    %155 = vector.shape_cast %154 : vector<1x256xf32> to vector<1x256xf32>
    %156 = vector.broadcast %155 : vector<1x256xf32> to vector<8x256xf32>
    %c117_26 = arith.constant 117 : index
    %157 = arith.index_cast %1 : i32 to index
    %158 = vector.load %arg1[%c117_26, %157] : memref<121x512xf32, #tpu.memory_space<vmem>>, vector<1x256xf32>
    %159 = vector.shape_cast %158 : vector<1x256xf32> to vector<1x256xf32>
    %160 = vector.broadcast %159 : vector<1x256xf32> to vector<8x256xf32>
    %c118_27 = arith.constant 118 : index
    %161 = arith.index_cast %1 : i32 to index
    %162 = vector.load %arg1[%c118_27, %161] : memref<121x512xf32, #tpu.memory_space<vmem>>, vector<1x256xf32>
    %163 = vector.shape_cast %162 : vector<1x256xf32> to vector<1x256xf32>
    %164 = vector.broadcast %163 : vector<1x256xf32> to vector<8x256xf32>
    %c119_28 = arith.constant 119 : index
    %165 = arith.index_cast %1 : i32 to index
    %166 = vector.load %arg1[%c119_28, %165] : memref<121x512xf32, #tpu.memory_space<vmem>>, vector<1x256xf32>
    %167 = vector.shape_cast %166 : vector<1x256xf32> to vector<1x256xf32>
    %168 = vector.broadcast %167 : vector<1x256xf32> to vector<8x256xf32>
    %c120_29 = arith.constant 120 : index
    %169 = arith.index_cast %1 : i32 to index
    %170 = vector.load %arg1[%c120_29, %169] : memref<121x512xf32, #tpu.memory_space<vmem>>, vector<1x256xf32>
    %171 = vector.shape_cast %170 : vector<1x256xf32> to vector<1x256xf32>
    %172 = vector.broadcast %171 : vector<1x256xf32> to vector<8x256xf32>
    %173 = arith.mulf %116, %156 : vector<8x256xf32>
    %cst_30 = arith.constant -0.534522474 : f32
    %174 = vector.broadcast %cst_30 : f32 to vector<8x256xf32>
    %175 = arith.mulf %174, %173 : vector<8x256xf32>
    %176 = arith.mulf %116, %160 : vector<8x256xf32>
    %cst_31 = arith.constant 0.462910056 : f32
    %177 = vector.broadcast %cst_31 : f32 to vector<8x256xf32>
    %178 = arith.mulf %177, %176 : vector<8x256xf32>
    %179 = arith.mulf %116, %164 : vector<8x256xf32>
    %cst_32 = arith.constant -0.534522474 : f32
    %180 = vector.broadcast %cst_32 : f32 to vector<8x256xf32>
    %181 = arith.mulf %180, %179 : vector<8x256xf32>
    %182 = arith.mulf %116, %168 : vector<8x256xf32>
    %cst_33 = arith.constant 0.462910056 : f32
    %183 = vector.broadcast %cst_33 : f32 to vector<8x256xf32>
    %184 = arith.mulf %183, %182 : vector<8x256xf32>
    %185 = arith.mulf %118, %156 : vector<8x256xf32>
    %cst_34 = arith.constant 0.462910056 : f32
    %186 = vector.broadcast %cst_34 : f32 to vector<8x256xf32>
    %187 = arith.mulf %186, %185 : vector<8x256xf32>
    %188 = arith.addf %178, %187 : vector<8x256xf32>
    %189 = arith.mulf %118, %160 : vector<8x256xf32>
    %cst_35 = arith.constant 0.267261237 : f32
    %190 = vector.broadcast %cst_35 : f32 to vector<8x256xf32>
    %191 = arith.mulf %190, %189 : vector<8x256xf32>
    %192 = arith.addf %175, %191 : vector<8x256xf32>
    %cst_36 = arith.constant -0.462910056 : f32
    %193 = vector.broadcast %cst_36 : f32 to vector<8x256xf32>
    %194 = arith.mulf %193, %189 : vector<8x256xf32>
    %195 = arith.mulf %118, %164 : vector<8x256xf32>
    %cst_37 = arith.constant 0.267261237 : f32
    %196 = vector.broadcast %cst_37 : f32 to vector<8x256xf32>
    %197 = arith.mulf %196, %195 : vector<8x256xf32>
    %198 = arith.addf %184, %197 : vector<8x256xf32>
    %199 = arith.mulf %118, %168 : vector<8x256xf32>
    %cst_38 = arith.constant 0.462910056 : f32
    %200 = vector.broadcast %cst_38 : f32 to vector<8x256xf32>
    %201 = arith.mulf %200, %199 : vector<8x256xf32>
    %202 = arith.addf %181, %201 : vector<8x256xf32>
    %203 = arith.mulf %118, %172 : vector<8x256xf32>
    %cst_39 = arith.constant -0.462910056 : f32
    %204 = vector.broadcast %cst_39 : f32 to vector<8x256xf32>
    %205 = arith.mulf %204, %203 : vector<8x256xf32>
    %206 = arith.addf %198, %205 : vector<8x256xf32>
    %207 = arith.mulf %120, %156 : vector<8x256xf32>
    %cst_40 = arith.constant -0.534522474 : f32
    %208 = vector.broadcast %cst_40 : f32 to vector<8x256xf32>
    %209 = arith.mulf %208, %207 : vector<8x256xf32>
    %210 = arith.addf %202, %209 : vector<8x256xf32>
    %211 = arith.mulf %120, %160 : vector<8x256xf32>
    %cst_41 = arith.constant 0.267261237 : f32
    %212 = vector.broadcast %cst_41 : f32 to vector<8x256xf32>
    %213 = arith.mulf %212, %211 : vector<8x256xf32>
    %214 = arith.addf %206, %213 : vector<8x256xf32>
    %215 = arith.mulf %120, %164 : vector<8x256xf32>
    %cst_42 = arith.constant 0.534522474 : f32
    %216 = vector.broadcast %cst_42 : f32 to vector<8x256xf32>
    %217 = arith.mulf %216, %215 : vector<8x256xf32>
    %218 = arith.addf %192, %217 : vector<8x256xf32>
    %219 = arith.mulf %120, %168 : vector<8x256xf32>
    %cst_43 = arith.constant 0.267261237 : f32
    %220 = vector.broadcast %cst_43 : f32 to vector<8x256xf32>
    %221 = arith.mulf %220, %219 : vector<8x256xf32>
    %222 = arith.addf %188, %221 : vector<8x256xf32>
    %223 = arith.mulf %120, %172 : vector<8x256xf32>
    %cst_44 = arith.constant -0.534522474 : f32
    %224 = vector.broadcast %cst_44 : f32 to vector<8x256xf32>
    %225 = arith.mulf %224, %223 : vector<8x256xf32>
    %226 = arith.addf %194, %225 : vector<8x256xf32>
    %227 = arith.mulf %122, %156 : vector<8x256xf32>
    %cst_45 = arith.constant 0.462910056 : f32
    %228 = vector.broadcast %cst_45 : f32 to vector<8x256xf32>
    %229 = arith.mulf %228, %227 : vector<8x256xf32>
    %230 = arith.addf %214, %229 : vector<8x256xf32>
    %231 = arith.mulf %122, %160 : vector<8x256xf32>
    %cst_46 = arith.constant 0.462910056 : f32
    %232 = vector.broadcast %cst_46 : f32 to vector<8x256xf32>
    %233 = arith.mulf %232, %231 : vector<8x256xf32>
    %234 = arith.addf %210, %233 : vector<8x256xf32>
    %235 = arith.mulf %122, %164 : vector<8x256xf32>
    %cst_47 = arith.constant 0.267261237 : f32
    %236 = vector.broadcast %cst_47 : f32 to vector<8x256xf32>
    %237 = arith.mulf %236, %235 : vector<8x256xf32>
    %238 = arith.addf %222, %237 : vector<8x256xf32>
    %239 = arith.mulf %122, %168 : vector<8x256xf32>
    %cst_48 = arith.constant 0.267261237 : f32
    %240 = vector.broadcast %cst_48 : f32 to vector<8x256xf32>
    %241 = arith.mulf %240, %239 : vector<8x256xf32>
    %242 = arith.addf %218, %241 : vector<8x256xf32>
    %cst_49 = arith.constant 0.462910056 : f32
    %243 = vector.broadcast %cst_49 : f32 to vector<8x256xf32>
    %244 = arith.mulf %243, %239 : vector<8x256xf32>
    %245 = arith.addf %226, %244 : vector<8x256xf32>
    %246 = arith.mulf %122, %172 : vector<8x256xf32>
    %cst_50 = arith.constant 0.462910056 : f32
    %247 = vector.broadcast %cst_50 : f32 to vector<8x256xf32>
    %248 = arith.mulf %247, %246 : vector<8x256xf32>
    %249 = arith.addf %238, %248 : vector<8x256xf32>
    %250 = arith.mulf %124, %160 : vector<8x256xf32>
    %cst_51 = arith.constant -0.462910056 : f32
    %251 = vector.broadcast %cst_51 : f32 to vector<8x256xf32>
    %252 = arith.mulf %251, %250 : vector<8x256xf32>
    %253 = arith.addf %230, %252 : vector<8x256xf32>
    %254 = arith.mulf %124, %164 : vector<8x256xf32>
    %cst_52 = arith.constant -0.534522474 : f32
    %255 = vector.broadcast %cst_52 : f32 to vector<8x256xf32>
    %256 = arith.mulf %255, %254 : vector<8x256xf32>
    %257 = arith.addf %245, %256 : vector<8x256xf32>
    %258 = arith.mulf %124, %168 : vector<8x256xf32>
    %cst_53 = arith.constant 0.462910056 : f32
    %259 = vector.broadcast %cst_53 : f32 to vector<8x256xf32>
    %260 = arith.mulf %259, %258 : vector<8x256xf32>
    %261 = arith.addf %249, %260 : vector<8x256xf32>
    %262 = arith.mulf %124, %172 : vector<8x256xf32>
    %cst_54 = arith.constant -0.534522474 : f32
    %263 = vector.broadcast %cst_54 : f32 to vector<8x256xf32>
    %264 = arith.mulf %263, %262 : vector<8x256xf32>
    %265 = arith.addf %242, %264 : vector<8x256xf32>
    %266 = arith.mulf %152, %234 : vector<8x256xf32>
    %267 = arith.addf %146, %266 : vector<8x256xf32>
    %268 = arith.mulf %152, %253 : vector<8x256xf32>
    %269 = arith.addf %147, %268 : vector<8x256xf32>
    %270 = arith.mulf %152, %265 : vector<8x256xf32>
    %271 = arith.addf %148, %270 : vector<8x256xf32>
    %272 = arith.mulf %152, %261 : vector<8x256xf32>
    %273 = arith.addf %149, %272 : vector<8x256xf32>
    %274 = arith.mulf %152, %257 : vector<8x256xf32>
    %275 = arith.addf %150, %274 : vector<8x256xf32>
    %c32_55 = arith.constant 32 : index
    %276 = arith.index_cast %1 : i32 to index
    %277 = vector.load %arg2[%c32_55, %276] : memref<72x512xf32, #tpu.memory_space<vmem>>, vector<8x256xf32>
    tpu.vector_store %arg2[%c32_55, %276], %267 {strides = array<i32>} : memref<72x512xf32, #tpu.memory_space<vmem>>, vector<8x256xf32>,
    %c40_56 = arith.constant 40 : index
    %278 = arith.index_cast %1 : i32 to index
    %279 = vector.load %arg2[%c40_56, %278] : memref<72x512xf32, #tpu.memory_space<vmem>>, vector<8x256xf32>
    tpu.vector_store %arg2[%c40_56, %278], %269 {strides = array<i32>} : memref<72x512xf32, #tpu.memory_space<vmem>>, vector<8x256xf32>,
    %c48_57 = arith.constant 48 : index
    %280 = arith.index_cast %1 : i32 to index
    %281 = vector.load %arg2[%c48_57, %280] : memref<72x512xf32, #tpu.memory_space<vmem>>, vector<8x256xf32>
    tpu.vector_store %arg2[%c48_57, %280], %271 {strides = array<i32>} : memref<72x512xf32, #tpu.memory_space<vmem>>, vector<8x256xf32>,
    %c56_58 = arith.constant 56 : index
    %282 = arith.index_cast %1 : i32 to index
    %283 = vector.load %arg2[%c56_58, %282] : memref<72x512xf32, #tpu.memory_space<vmem>>, vector<8x256xf32>
    tpu.vector_store %arg2[%c56_58, %282], %273 {strides = array<i32>} : memref<72x512xf32, #tpu.memory_space<vmem>>, vector<8x256xf32>,
    %c64_59 = arith.constant 64 : index
    %284 = arith.index_cast %1 : i32 to index
    %285 = vector.load %arg2[%c64_59, %284] : memref<72x512xf32, #tpu.memory_space<vmem>>, vector<8x256xf32>
    tpu.vector_store %arg2[%c64_59, %284], %275 {strides = array<i32>} : memref<72x512xf32, #tpu.memory_space<vmem>>, vector<8x256xf32>,
    %c1_i32 = arith.constant 1 : i32
    %c256_i32_60 = arith.constant 256 : i32
    %286 = arith.muli %c1_i32, %c256_i32_60 : i32
    %287 = tpu.assume_multiple %286, 256 : i32
    %c0_61 = arith.constant 0 : index
    %288 = arith.index_cast %287 : i32 to index
    %289 = vector.load %arg1[%c0_61, %288] : memref<121x512xf32, #tpu.memory_space<vmem>>, vector<8x256xf32>
    %c72_62 = arith.constant 72 : index
    %290 = arith.index_cast %287 : i32 to index
    %291 = vector.load %arg1[%c72_62, %290] : memref<121x512xf32, #tpu.memory_space<vmem>>, vector<8x256xf32>
    %c112_63 = arith.constant 112 : index
    %292 = arith.index_cast %287 : i32 to index
    %293 = vector.load %arg1[%c112_63, %292] : memref<121x512xf32, #tpu.memory_space<vmem>>, vector<1x256xf32>
    %294 = vector.shape_cast %293 : vector<1x256xf32> to vector<1x256xf32>
    %295 = vector.broadcast %294 : vector<1x256xf32> to vector<8x256xf32>
    %296 = arith.mulf %289, %295 : vector<8x256xf32>
    %cst_64 = arith.constant 1.000000e+00 : f32
    %297 = vector.broadcast %cst_64 : f32 to vector<8x256xf32>
    %298 = arith.mulf %297, %296 : vector<8x256xf32>
    %299 = arith.mulf %291, %298 : vector<8x256xf32>
    %c0_65 = arith.constant 0 : index
    %300 = arith.index_cast %287 : i32 to index
    %301 = vector.load %arg2[%c0_65, %300] : memref<72x512xf32, #tpu.memory_space<vmem>>, vector<8x256xf32>
    tpu.vector_store %arg2[%c0_65, %300], %299 {strides = array<i32>} : memref<72x512xf32, #tpu.memory_space<vmem>>, vector<8x256xf32>,
    %c8_66 = arith.constant 8 : index
    %302 = arith.index_cast %287 : i32 to index
    %303 = vector.load %arg1[%c8_66, %302] : memref<121x512xf32, #tpu.memory_space<vmem>>, vector<8x256xf32>
    %c16_67 = arith.constant 16 : index
    %304 = arith.index_cast %287 : i32 to index
    %305 = vector.load %arg1[%c16_67, %304] : memref<121x512xf32, #tpu.memory_space<vmem>>, vector<8x256xf32>
    %c24_68 = arith.constant 24 : index
    %306 = arith.index_cast %287 : i32 to index
    %307 = vector.load %arg1[%c24_68, %306] : memref<121x512xf32, #tpu.memory_space<vmem>>, vector<8x256xf32>
    %c80_69 = arith.constant 80 : index
    %308 = arith.index_cast %287 : i32 to index
    %309 = vector.load %arg1[%c80_69, %308] : memref<121x512xf32, #tpu.memory_space<vmem>>, vector<8x256xf32>
    %c112_70 = arith.constant 112 : index
    %310 = arith.index_cast %287 : i32 to index
    %311 = vector.load %arg1[%c112_70, %310] : memref<121x512xf32, #tpu.memory_space<vmem>>, vector<1x256xf32>
    %312 = vector.shape_cast %311 : vector<1x256xf32> to vector<1x256xf32>
    %313 = vector.broadcast %312 : vector<1x256xf32> to vector<8x256xf32>
    %314 = arith.mulf %303, %313 : vector<8x256xf32>
    %cst_71 = arith.constant 1.000000e+00 : f32
    %315 = vector.broadcast %cst_71 : f32 to vector<8x256xf32>
    %316 = arith.mulf %315, %314 : vector<8x256xf32>
    %317 = arith.mulf %305, %313 : vector<8x256xf32>
    %cst_72 = arith.constant 1.000000e+00 : f32
    %318 = vector.broadcast %cst_72 : f32 to vector<8x256xf32>
    %319 = arith.mulf %318, %317 : vector<8x256xf32>
    %320 = arith.mulf %307, %313 : vector<8x256xf32>
    %cst_73 = arith.constant 1.000000e+00 : f32
    %321 = vector.broadcast %cst_73 : f32 to vector<8x256xf32>
    %322 = arith.mulf %321, %320 : vector<8x256xf32>
    %323 = arith.mulf %309, %316 : vector<8x256xf32>
    %324 = arith.mulf %309, %319 : vector<8x256xf32>
    %325 = arith.mulf %309, %322 : vector<8x256xf32>
    %c88_74 = arith.constant 88 : index
    %326 = arith.index_cast %287 : i32 to index
    %327 = vector.load %arg1[%c88_74, %326] : memref<121x512xf32, #tpu.memory_space<vmem>>, vector<8x256xf32>
    %c116_75 = arith.constant 116 : index
    %328 = arith.index_cast %287 : i32 to index
    %329 = vector.load %arg1[%c116_75, %328] : memref<121x512xf32, #tpu.memory_space<vmem>>, vector<1x256xf32>
    %330 = vector.shape_cast %329 : vector<1x256xf32> to vector<1x256xf32>
    %331 = vector.broadcast %330 : vector<1x256xf32> to vector<8x256xf32>
    %c117_76 = arith.constant 117 : index
    %332 = arith.index_cast %287 : i32 to index
    %333 = vector.load %arg1[%c117_76, %332] : memref<121x512xf32, #tpu.memory_space<vmem>>, vector<1x256xf32>
    %334 = vector.shape_cast %333 : vector<1x256xf32> to vector<1x256xf32>
    %335 = vector.broadcast %334 : vector<1x256xf32> to vector<8x256xf32>
    %c118_77 = arith.constant 118 : index
    %336 = arith.index_cast %287 : i32 to index
    %337 = vector.load %arg1[%c118_77, %336] : memref<121x512xf32, #tpu.memory_space<vmem>>, vector<1x256xf32>
    %338 = vector.shape_cast %337 : vector<1x256xf32> to vector<1x256xf32>
    %339 = vector.broadcast %338 : vector<1x256xf32> to vector<8x256xf32>
    %c119_78 = arith.constant 119 : index
    %340 = arith.index_cast %287 : i32 to index
    %341 = vector.load %arg1[%c119_78, %340] : memref<121x512xf32, #tpu.memory_space<vmem>>, vector<1x256xf32>
    %342 = vector.shape_cast %341 : vector<1x256xf32> to vector<1x256xf32>
    %343 = vector.broadcast %342 : vector<1x256xf32> to vector<8x256xf32>
    %c120_79 = arith.constant 120 : index
    %344 = arith.index_cast %287 : i32 to index
    %345 = vector.load %arg1[%c120_79, %344] : memref<121x512xf32, #tpu.memory_space<vmem>>, vector<1x256xf32>
    %346 = vector.shape_cast %345 : vector<1x256xf32> to vector<1x256xf32>
    %347 = vector.broadcast %346 : vector<1x256xf32> to vector<8x256xf32>
    %348 = arith.mulf %303, %331 : vector<8x256xf32>
    %cst_80 = arith.constant 0.547722578 : f32
    %349 = vector.broadcast %cst_80 : f32 to vector<8x256xf32>
    %350 = arith.mulf %349, %348 : vector<8x256xf32>
    %351 = arith.mulf %303, %335 : vector<8x256xf32>
    %cst_81 = arith.constant 0.547722578 : f32
    %352 = vector.broadcast %cst_81 : f32 to vector<8x256xf32>
    %353 = arith.mulf %352, %351 : vector<8x256xf32>
    %354 = arith.mulf %303, %339 : vector<8x256xf32>
    %cst_82 = arith.constant -0.316227764 : f32
    %355 = vector.broadcast %cst_82 : f32 to vector<8x256xf32>
    %356 = arith.mulf %355, %354 : vector<8x256xf32>
    %357 = arith.mulf %303, %347 : vector<8x256xf32>
    %cst_83 = arith.constant -0.547722578 : f32
    %358 = vector.broadcast %cst_83 : f32 to vector<8x256xf32>
    %359 = arith.mulf %358, %357 : vector<8x256xf32>
    %360 = arith.addf %356, %359 : vector<8x256xf32>
    %361 = arith.mulf %305, %335 : vector<8x256xf32>
    %cst_84 = arith.constant 0.547722578 : f32
    %362 = vector.broadcast %cst_84 : f32 to vector<8x256xf32>
    %363 = arith.mulf %362, %361 : vector<8x256xf32>
    %364 = arith.addf %360, %363 : vector<8x256xf32>
    %365 = arith.mulf %305, %339 : vector<8x256xf32>
    %cst_85 = arith.constant 0.632455527 : f32
    %366 = vector.broadcast %cst_85 : f32 to vector<8x256xf32>
    %367 = arith.mulf %366, %365 : vector<8x256xf32>
    %368 = arith.addf %353, %367 : vector<8x256xf32>
    %369 = arith.mulf %305, %343 : vector<8x256xf32>
    %cst_86 = arith.constant 0.547722578 : f32
    %370 = vector.broadcast %cst_86 : f32 to vector<8x256xf32>
    %371 = arith.mulf %370, %369 : vector<8x256xf32>
    %372 = arith.addf %350, %371 : vector<8x256xf32>
    %373 = arith.mulf %307, %331 : vector<8x256xf32>
    %cst_87 = arith.constant 0.547722578 : f32
    %374 = vector.broadcast %cst_87 : f32 to vector<8x256xf32>
    %375 = arith.mulf %374, %373 : vector<8x256xf32>
    %376 = arith.addf %364, %375 : vector<8x256xf32>
    %377 = arith.mulf %307, %339 : vector<8x256xf32>
    %cst_88 = arith.constant -0.316227764 : f32
    %378 = vector.broadcast %cst_88 : f32 to vector<8x256xf32>
    %379 = arith.mulf %378, %377 : vector<8x256xf32>
    %380 = arith.addf %372, %379 : vector<8x256xf32>
    %381 = arith.mulf %307, %343 : vector<8x256xf32>
    %cst_89 = arith.constant 0.547722578 : f32
    %382 = vector.broadcast %cst_89 : f32 to vector<8x256xf32>
    %383 = arith.mulf %382, %381 : vector<8x256xf32>
    %384 = arith.addf %368, %383 : vector<8x256xf32>
    %385 = arith.mulf %307, %347 : vector<8x256xf32>
    %cst_90 = arith.constant 0.547722578 : f32
    %386 = vector.broadcast %cst_90 : f32 to vector<8x256xf32>
    %387 = arith.mulf %386, %385 : vector<8x256xf32>
    %388 = arith.addf %380, %387 : vector<8x256xf32>
    %389 = arith.mulf %327, %376 : vector<8x256xf32>
    %390 = arith.addf %323, %389 : vector<8x256xf32>
    %391 = arith.mulf %327, %384 : vector<8x256xf32>
    %392 = arith.addf %324, %391 : vector<8x256xf32>
    %393 = arith.mulf %327, %388 : vector<8x256xf32>
    %394 = arith.addf %325, %393 : vector<8x256xf32>
    %c8_91 = arith.constant 8 : index
    %395 = arith.index_cast %287 : i32 to index
    %396 = vector.load %arg2[%c8_91, %395] : memref<72x512xf32, #tpu.memory_space<vmem>>, vector<8x256xf32>
    tpu.vector_store %arg2[%c8_91, %395], %390 {strides = array<i32>} : memref<72x512xf32, #tpu.memory_space<vmem>>, vector<8x256xf32>,
    %c16_92 = arith.constant 16 : index
    %397 = arith.index_cast %287 : i32 to index
    %398 = vector.load %arg2[%c16_92, %397] : memref<72x512xf32, #tpu.memory_space<vmem>>, vector<8x256xf32>
    tpu.vector_store %arg2[%c16_92, %397], %392 {strides = array<i32>} : memref<72x512xf32, #tpu.memory_space<vmem>>, vector<8x256xf32>,
    %c24_93 = arith.constant 24 : index
    %399 = arith.index_cast %287 : i32 to index
    %400 = vector.load %arg2[%c24_93, %399] : memref<72x512xf32, #tpu.memory_space<vmem>>, vector<8x256xf32>
    tpu.vector_store %arg2[%c24_93, %399], %394 {strides = array<i32>} : memref<72x512xf32, #tpu.memory_space<vmem>>, vector<8x256xf32>,
    %c32_94 = arith.constant 32 : index
    %401 = arith.index_cast %287 : i32 to index
    %402 = vector.load %arg1[%c32_94, %401] : memref<121x512xf32, #tpu.memory_space<vmem>>, vector<8x256xf32>
    %c40_95 = arith.constant 40 : index
    %403 = arith.index_cast %287 : i32 to index
    %404 = vector.load %arg1[%c40_95, %403] : memref<121x512xf32, #tpu.memory_space<vmem>>, vector<8x256xf32>
    %c48_96 = arith.constant 48 : index
    %405 = arith.index_cast %287 : i32 to index
    %406 = vector.load %arg1[%c48_96, %405] : memref<121x512xf32, #tpu.memory_space<vmem>>, vector<8x256xf32>
    %c56_97 = arith.constant 56 : index
    %407 = arith.index_cast %287 : i32 to index
    %408 = vector.load %arg1[%c56_97, %407] : memref<121x512xf32, #tpu.memory_space<vmem>>, vector<8x256xf32>
    %c64_98 = arith.constant 64 : index
    %409 = arith.index_cast %287 : i32 to index
    %410 = vector.load %arg1[%c64_98, %409] : memref<121x512xf32, #tpu.memory_space<vmem>>, vector<8x256xf32>
    %c96_99 = arith.constant 96 : index
    %411 = arith.index_cast %287 : i32 to index
    %412 = vector.load %arg1[%c96_99, %411] : memref<121x512xf32, #tpu.memory_space<vmem>>, vector<8x256xf32>
    %c112_100 = arith.constant 112 : index
    %413 = arith.index_cast %287 : i32 to index
    %414 = vector.load %arg1[%c112_100, %413] : memref<121x512xf32, #tpu.memory_space<vmem>>, vector<1x256xf32>
    %415 = vector.shape_cast %414 : vector<1x256xf32> to vector<1x256xf32>
    %416 = vector.broadcast %415 : vector<1x256xf32> to vector<8x256xf32>
    %417 = arith.mulf %402, %416 : vector<8x256xf32>
    %cst_101 = arith.constant 1.000000e+00 : f32
    %418 = vector.broadcast %cst_101 : f32 to vector<8x256xf32>
    %419 = arith.mulf %418, %417 : vector<8x256xf32>
    %420 = arith.mulf %404, %416 : vector<8x256xf32>
    %cst_102 = arith.constant 1.000000e+00 : f32
    %421 = vector.broadcast %cst_102 : f32 to vector<8x256xf32>
    %422 = arith.mulf %421, %420 : vector<8x256xf32>
    %423 = arith.mulf %406, %416 : vector<8x256xf32>
    %cst_103 = arith.constant 1.000000e+00 : f32
    %424 = vector.broadcast %cst_103 : f32 to vector<8x256xf32>
    %425 = arith.mulf %424, %423 : vector<8x256xf32>
    %426 = arith.mulf %408, %416 : vector<8x256xf32>
    %cst_104 = arith.constant 1.000000e+00 : f32
    %427 = vector.broadcast %cst_104 : f32 to vector<8x256xf32>
    %428 = arith.mulf %427, %426 : vector<8x256xf32>
    %429 = arith.mulf %410, %416 : vector<8x256xf32>
    %cst_105 = arith.constant 1.000000e+00 : f32
    %430 = vector.broadcast %cst_105 : f32 to vector<8x256xf32>
    %431 = arith.mulf %430, %429 : vector<8x256xf32>
    %432 = arith.mulf %412, %419 : vector<8x256xf32>
    %433 = arith.mulf %412, %422 : vector<8x256xf32>
    %434 = arith.mulf %412, %425 : vector<8x256xf32>
    %435 = arith.mulf %412, %428 : vector<8x256xf32>
    %436 = arith.mulf %412, %431 : vector<8x256xf32>
    %c104_106 = arith.constant 104 : index
    %437 = arith.index_cast %287 : i32 to index
    %438 = vector.load %arg1[%c104_106, %437] : memref<121x512xf32, #tpu.memory_space<vmem>>, vector<8x256xf32>
    %c116_107 = arith.constant 116 : index
    %439 = arith.index_cast %287 : i32 to index
    %440 = vector.load %arg1[%c116_107, %439] : memref<121x512xf32, #tpu.memory_space<vmem>>, vector<1x256xf32>
    %441 = vector.shape_cast %440 : vector<1x256xf32> to vector<1x256xf32>
    %442 = vector.broadcast %441 : vector<1x256xf32> to vector<8x256xf32>
    %c117_108 = arith.constant 117 : index
    %443 = arith.index_cast %287 : i32 to index
    %444 = vector.load %arg1[%c117_108, %443] : memref<121x512xf32, #tpu.memory_space<vmem>>, vector<1x256xf32>
    %445 = vector.shape_cast %444 : vector<1x256xf32> to vector<1x256xf32>
    %446 = vector.broadcast %445 : vector<1x256xf32> to vector<8x256xf32>
    %c118_109 = arith.constant 118 : index
    %447 = arith.index_cast %287 : i32 to index
    %448 = vector.load %arg1[%c118_109, %447] : memref<121x512xf32, #tpu.memory_space<vmem>>, vector<1x256xf32>
    %449 = vector.shape_cast %448 : vector<1x256xf32> to vector<1x256xf32>
    %450 = vector.broadcast %449 : vector<1x256xf32> to vector<8x256xf32>
    %c119_110 = arith.constant 119 : index
    %451 = arith.index_cast %287 : i32 to index
    %452 = vector.load %arg1[%c119_110, %451] : memref<121x512xf32, #tpu.memory_space<vmem>>, vector<1x256xf32>
    %453 = vector.shape_cast %452 : vector<1x256xf32> to vector<1x256xf32>
    %454 = vector.broadcast %453 : vector<1x256xf32> to vector<8x256xf32>
    %c120_111 = arith.constant 120 : index
    %455 = arith.index_cast %287 : i32 to index
    %456 = vector.load %arg1[%c120_111, %455] : memref<121x512xf32, #tpu.memory_space<vmem>>, vector<1x256xf32>
    %457 = vector.shape_cast %456 : vector<1x256xf32> to vector<1x256xf32>
    %458 = vector.broadcast %457 : vector<1x256xf32> to vector<8x256xf32>
    %459 = arith.mulf %402, %442 : vector<8x256xf32>
    %cst_112 = arith.constant -0.534522474 : f32
    %460 = vector.broadcast %cst_112 : f32 to vector<8x256xf32>
    %461 = arith.mulf %460, %459 : vector<8x256xf32>
    %462 = arith.mulf %402, %446 : vector<8x256xf32>
    %cst_113 = arith.constant 0.462910056 : f32
    %463 = vector.broadcast %cst_113 : f32 to vector<8x256xf32>
    %464 = arith.mulf %463, %462 : vector<8x256xf32>
    %465 = arith.mulf %402, %450 : vector<8x256xf32>
    %cst_114 = arith.constant -0.534522474 : f32
    %466 = vector.broadcast %cst_114 : f32 to vector<8x256xf32>
    %467 = arith.mulf %466, %465 : vector<8x256xf32>
    %468 = arith.mulf %402, %454 : vector<8x256xf32>
    %cst_115 = arith.constant 0.462910056 : f32
    %469 = vector.broadcast %cst_115 : f32 to vector<8x256xf32>
    %470 = arith.mulf %469, %468 : vector<8x256xf32>
    %471 = arith.mulf %404, %442 : vector<8x256xf32>
    %cst_116 = arith.constant 0.462910056 : f32
    %472 = vector.broadcast %cst_116 : f32 to vector<8x256xf32>
    %473 = arith.mulf %472, %471 : vector<8x256xf32>
    %474 = arith.addf %464, %473 : vector<8x256xf32>
    %475 = arith.mulf %404, %446 : vector<8x256xf32>
    %cst_117 = arith.constant 0.267261237 : f32
    %476 = vector.broadcast %cst_117 : f32 to vector<8x256xf32>
    %477 = arith.mulf %476, %475 : vector<8x256xf32>
    %478 = arith.addf %461, %477 : vector<8x256xf32>
    %cst_118 = arith.constant -0.462910056 : f32
    %479 = vector.broadcast %cst_118 : f32 to vector<8x256xf32>
    %480 = arith.mulf %479, %475 : vector<8x256xf32>
    %481 = arith.mulf %404, %450 : vector<8x256xf32>
    %cst_119 = arith.constant 0.267261237 : f32
    %482 = vector.broadcast %cst_119 : f32 to vector<8x256xf32>
    %483 = arith.mulf %482, %481 : vector<8x256xf32>
    %484 = arith.addf %470, %483 : vector<8x256xf32>
    %485 = arith.mulf %404, %454 : vector<8x256xf32>
    %cst_120 = arith.constant 0.462910056 : f32
    %486 = vector.broadcast %cst_120 : f32 to vector<8x256xf32>
    %487 = arith.mulf %486, %485 : vector<8x256xf32>
    %488 = arith.addf %467, %487 : vector<8x256xf32>
    %489 = arith.mulf %404, %458 : vector<8x256xf32>
    %cst_121 = arith.constant -0.462910056 : f32
    %490 = vector.broadcast %cst_121 : f32 to vector<8x256xf32>
    %491 = arith.mulf %490, %489 : vector<8x256xf32>
    %492 = arith.addf %484, %491 : vector<8x256xf32>
    %493 = arith.mulf %406, %442 : vector<8x256xf32>
    %cst_122 = arith.constant -0.534522474 : f32
    %494 = vector.broadcast %cst_122 : f32 to vector<8x256xf32>
    %495 = arith.mulf %494, %493 : vector<8x256xf32>
    %496 = arith.addf %488, %495 : vector<8x256xf32>
    %497 = arith.mulf %406, %446 : vector<8x256xf32>
    %cst_123 = arith.constant 0.267261237 : f32
    %498 = vector.broadcast %cst_123 : f32 to vector<8x256xf32>
    %499 = arith.mulf %498, %497 : vector<8x256xf32>
    %500 = arith.addf %492, %499 : vector<8x256xf32>
    %501 = arith.mulf %406, %450 : vector<8x256xf32>
    %cst_124 = arith.constant 0.534522474 : f32
    %502 = vector.broadcast %cst_124 : f32 to vector<8x256xf32>
    %503 = arith.mulf %502, %501 : vector<8x256xf32>
    %504 = arith.addf %478, %503 : vector<8x256xf32>
    %505 = arith.mulf %406, %454 : vector<8x256xf32>
    %cst_125 = arith.constant 0.267261237 : f32
    %506 = vector.broadcast %cst_125 : f32 to vector<8x256xf32>
    %507 = arith.mulf %506, %505 : vector<8x256xf32>
    %508 = arith.addf %474, %507 : vector<8x256xf32>
    %509 = arith.mulf %406, %458 : vector<8x256xf32>
    %cst_126 = arith.constant -0.534522474 : f32
    %510 = vector.broadcast %cst_126 : f32 to vector<8x256xf32>
    %511 = arith.mulf %510, %509 : vector<8x256xf32>
    %512 = arith.addf %480, %511 : vector<8x256xf32>
    %513 = arith.mulf %408, %442 : vector<8x256xf32>
    %cst_127 = arith.constant 0.462910056 : f32
    %514 = vector.broadcast %cst_127 : f32 to vector<8x256xf32>
    %515 = arith.mulf %514, %513 : vector<8x256xf32>
    %516 = arith.addf %500, %515 : vector<8x256xf32>
    %517 = arith.mulf %408, %446 : vector<8x256xf32>
    %cst_128 = arith.constant 0.462910056 : f32
    %518 = vector.broadcast %cst_128 : f32 to vector<8x256xf32>
    %519 = arith.mulf %518, %517 : vector<8x256xf32>
    %520 = arith.addf %496, %519 : vector<8x256xf32>
    %521 = arith.mulf %408, %450 : vector<8x256xf32>
    %cst_129 = arith.constant 0.267261237 : f32
    %522 = vector.broadcast %cst_129 : f32 to vector<8x256xf32>
    %523 = arith.mulf %522, %521 : vector<8x256xf32>
    %524 = arith.addf %508, %523 : vector<8x256xf32>
    %525 = arith.mulf %408, %454 : vector<8x256xf32>
    %cst_130 = arith.constant 0.267261237 : f32
    %526 = vector.broadcast %cst_130 : f32 to vector<8x256xf32>
    %527 = arith.mulf %526, %525 : vector<8x256xf32>
    %528 = arith.addf %504, %527 : vector<8x256xf32>
    %cst_131 = arith.constant 0.462910056 : f32
    %529 = vector.broadcast %cst_131 : f32 to vector<8x256xf32>
    %530 = arith.mulf %529, %525 : vector<8x256xf32>
    %531 = arith.addf %512, %530 : vector<8x256xf32>
    %532 = arith.mulf %408, %458 : vector<8x256xf32>
    %cst_132 = arith.constant 0.462910056 : f32
    %533 = vector.broadcast %cst_132 : f32 to vector<8x256xf32>
    %534 = arith.mulf %533, %532 : vector<8x256xf32>
    %535 = arith.addf %524, %534 : vector<8x256xf32>
    %536 = arith.mulf %410, %446 : vector<8x256xf32>
    %cst_133 = arith.constant -0.462910056 : f32
    %537 = vector.broadcast %cst_133 : f32 to vector<8x256xf32>
    %538 = arith.mulf %537, %536 : vector<8x256xf32>
    %539 = arith.addf %516, %538 : vector<8x256xf32>
    %540 = arith.mulf %410, %450 : vector<8x256xf32>
    %cst_134 = arith.constant -0.534522474 : f32
    %541 = vector.broadcast %cst_134 : f32 to vector<8x256xf32>
    %542 = arith.mulf %541, %540 : vector<8x256xf32>
    %543 = arith.addf %531, %542 : vector<8x256xf32>
    %544 = arith.mulf %410, %454 : vector<8x256xf32>
    %cst_135 = arith.constant 0.462910056 : f32
    %545 = vector.broadcast %cst_135 : f32 to vector<8x256xf32>
    %546 = arith.mulf %545, %544 : vector<8x256xf32>
    %547 = arith.addf %535, %546 : vector<8x256xf32>
    %548 = arith.mulf %410, %458 : vector<8x256xf32>
    %cst_136 = arith.constant -0.534522474 : f32
    %549 = vector.broadcast %cst_136 : f32 to vector<8x256xf32>
    %550 = arith.mulf %549, %548 : vector<8x256xf32>
    %551 = arith.addf %528, %550 : vector<8x256xf32>
    %552 = arith.mulf %438, %520 : vector<8x256xf32>
    %553 = arith.addf %432, %552 : vector<8x256xf32>
    %554 = arith.mulf %438, %539 : vector<8x256xf32>
    %555 = arith.addf %433, %554 : vector<8x256xf32>
    %556 = arith.mulf %438, %551 : vector<8x256xf32>
    %557 = arith.addf %434, %556 : vector<8x256xf32>
    %558 = arith.mulf %438, %547 : vector<8x256xf32>
    %559 = arith.addf %435, %558 : vector<8x256xf32>
    %560 = arith.mulf %438, %543 : vector<8x256xf32>
    %561 = arith.addf %436, %560 : vector<8x256xf32>
    %c32_137 = arith.constant 32 : index
    %562 = arith.index_cast %287 : i32 to index
    %563 = vector.load %arg2[%c32_137, %562] : memref<72x512xf32, #tpu.memory_space<vmem>>, vector<8x256xf32>
    tpu.vector_store %arg2[%c32_137, %562], %553 {strides = array<i32>} : memref<72x512xf32, #tpu.memory_space<vmem>>, vector<8x256xf32>,
    %c40_138 = arith.constant 40 : index
    %564 = arith.index_cast %287 : i32 to index
    %565 = vector.load %arg2[%c40_138, %564] : memref<72x512xf32, #tpu.memory_space<vmem>>, vector<8x256xf32>
    tpu.vector_store %arg2[%c40_138, %564], %555 {strides = array<i32>} : memref<72x512xf32, #tpu.memory_space<vmem>>, vector<8x256xf32>,
    %c48_139 = arith.constant 48 : index
    %566 = arith.index_cast %287 : i32 to index
    %567 = vector.load %arg2[%c48_139, %566] : memref<72x512xf32, #tpu.memory_space<vmem>>, vector<8x256xf32>
    tpu.vector_store %arg2[%c48_139, %566], %557 {strides = array<i32>} : memref<72x512xf32, #tpu.memory_space<vmem>>, vector<8x256xf32>,
    %c56_140 = arith.constant 56 : index
    %568 = arith.index_cast %287 : i32 to index
    %569 = vector.load %arg2[%c56_140, %568] : memref<72x512xf32, #tpu.memory_space<vmem>>, vector<8x256xf32>
    tpu.vector_store %arg2[%c56_140, %568], %559 {strides = array<i32>} : memref<72x512xf32, #tpu.memory_space<vmem>>, vector<8x256xf32>,
    %c64_141 = arith.constant 64 : index
    %570 = arith.index_cast %287 : i32 to index
    %571 = vector.load %arg2[%c64_141, %570] : memref<72x512xf32, #tpu.memory_space<vmem>>, vector<8x256xf32>
    tpu.vector_store %arg2[%c64_141, %570], %561 {strides = array<i32>} : memref<72x512xf32, #tpu.memory_space<vmem>>, vector<8x256xf32>,
    %c2_i32 = arith.constant 2 : i32
    return
  }
  func.func @transform_0(%arg0: i32) -> (i32, i32) {
    %c0_i32 = arith.constant 0 : i32
    %c0_i32_0 = arith.constant 0 : i32
    return %c0_i32, %arg0 : i32, i32
  }
  func.func @transform_1(%arg0: i32) -> (i32, i32) {
    %c0_i32 = arith.constant 0 : i32
    %c0_i32_0 = arith.constant 0 : i32
    return %c0_i32, %arg0 : i32, i32
  }
}

</mosaic_0001>

<llo_original>
// kernel: depthwise_tensor_product.1
$region0: #{depthwise_tensor_product.1}
  #allocation0 [shape = 'u32[]', space=smem, size = 0x4, offset = 0x4, fixed_abs, tag = 'smem constant byte address 0x4 - core index']
  #allocation1 [shape = 'u32[144,128]{1,0:T(1,128)}', space=vmem, size = 0x12000, scoped, tag = 'internal scratch']
  %s0 = inlined_call_operand.vmem [shape: f32[121,512], index: 0, kind: input, shape index: {}]
  %s1 = inlined_call_operand.vmem [shape: f32[72,512], index: 1, kind: output, shape index: {}]
  %s2 = sld [smem:[#allocation0]]
  $region14: #{depthwise_tensor_product.1} parent=0
    _
  %s4 = ssub.s32 1, %s2
  %s5 = scalar_select 0, %s4, %s2
  // Predicated region
  $region2: #{depthwise_tensor_product.1} parent=0 // pred_check
    _
  $region3: #{depthwise_tensor_product.1} parent=0 // pred_check_branch
    %7 = sbr.rel (0) target = $region5
  $region4: #{depthwise_tensor_product.1} parent=0 // pred_region
    _
  $region5: #{depthwise_tensor_product.1} parent=0 // pred_fallthru
    _
  %v8 = vld [vmem:[%s0] sm:$0xff]
  %v9 = vld [vmem:[%s0 + $0x8] sm:$0xff]
  %v10 = vld [vmem:[%s0 + $0x120] sm:$0xff]
  %v11 = vld [vmem:[%s0 + $0x128] sm:$0xff]
  %s12 = scalar_lea.vmem %s0, 448
  %v13 = vld [vmem:[%s12] ss:$8 sm:$0x3]
  %v15 = vlaneseq
  %v16 = vshrl.u32 %v15, 7
  %v17 = vsub.s32 0, %v16
  %v18 = vrot.slane %v13, %v17
  %v19 = vlaneseq
  %v20 = vshrl.u32 %v19, 7
  %v21 = vsub.s32 1, %v20
  %v22 = vrot.slane %v13, %v21
  %v25 = vmul.f32 %v8, %v18
  %v26 = vmul.f32 %v9, %v22
  %v27 = vmul.f32 %v10, %v25
  %v28 = vmul.f32 %v11, %v26
  %29 = vst [vmem:[%s1] sm:$0xff] %v27
  %30 = vst [vmem:[%s1 + $0x8] sm:$0xff] %v28
  %v31 = vld [vmem:[%s0 + $0x20] sm:$0xff]
  %v32 = vld [vmem:[%s0 + $0x28] sm:$0xff]
  %v33 = vld [vmem:[%s0 + $0x40] sm:$0xff]
  %v34 = vld [vmem:[%s0 + $0x48] sm:$0xff]
  %v35 = vld [vmem:[%s0 + $0x60] sm:$0xff]
  %v36 = vld [vmem:[%s0 + $0x68] sm:$0xff]
  %v37 = vld [vmem:[%s0 + $0x140] sm:$0xff]
  %v38 = vld [vmem:[%s0 + $0x148] sm:$0xff]
  %v39 = vld [vmem:[%s12] ss:$8 sm:$0x3]
  %v41 = vlaneseq
  %v42 = vshrl.u32 %v41, 7
  %v43 = vsub.s32 0, %v42
  %v44 = vrot.slane %v39, %v43
  %v45 = vlaneseq
  %v46 = vshrl.u32 %v45, 7
  %v47 = vsub.s32 1, %v46
  %v48 = vrot.slane %v39, %v47
  %v51 = vmul.f32 %v31, %v44
  %v52 = vmul.f32 %v32, %v48
  %v53 = vmul.f32 %v33, %v44
  %v54 = vmul.f32 %v34, %v48
  %v55 = vmul.f32 %v35, %v44
  %v56 = vmul.f32 %v36, %v48
  %v57 = vmul.f32 %v37, %v51
  %v58 = vmul.f32 %v38, %v52
  %v59 = vmul.f32 %v37, %v53
  %v60 = vmul.f32 %v38, %v54
  %v61 = vmul.f32 %v37, %v55
  %v62 = vmul.f32 %v38, %v56
  %v63 = vld [vmem:[%s0 + $0x160] sm:$0xff]
  %v64 = vld [vmem:[%s0 + $0x168] sm:$0xff]
  %s65 = scalar_lea.vmem %s0, 452
  %v66 = vld [vmem:[%s65] ss:$8 sm:$0x3]
  %v68 = vlaneseq
  %v69 = vshrl.u32 %v68, 7
  %v70 = vsub.s32 0, %v69
  %v71 = vrot.slane %v66, %v70
  %v72 = vlaneseq
  %v73 = vshrl.u32 %v72, 7
  %v74 = vsub.s32 1, %v73
  %v75 = vrot.slane %v66, %v74
  %s78 = scalar_lea.vmem %s0, 453
  %v79 = vld [vmem:[%s78] ss:$8 sm:$0x3]
  %v81 = vlaneseq
  %v82 = vshrl.u32 %v81, 7
  %v83 = vsub.s32 0, %v82
  %v84 = vrot.slane %v79, %v83
  %v85 = vlaneseq
  %v86 = vshrl.u32 %v85, 7
  %v87 = vsub.s32 1, %v86
  %v88 = vrot.slane %v79, %v87
  %s91 = scalar_lea.vmem %s0, 454
  %v92 = vld [vmem:[%s91] ss:$8 sm:$0x3]
  %v94 = vlaneseq
  %v95 = vshrl.u32 %v94, 7
  %v96 = vsub.s32 0, %v95
  %v97 = vrot.slane %v92, %v96
  %v98 = vlaneseq
  %v99 = vshrl.u32 %v98, 7
  %v100 = vsub.s32 1, %v99
  %v101 = vrot.slane %v92, %v100
  %s104 = scalar_lea.vmem %s0, 455
  %v105 = vld [vmem:[%s104] ss:$8 sm:$0x3]
  %v107 = vlaneseq
  %v108 = vshrl.u32 %v107, 7
  %v109 = vsub.s32 0, %v108
  %v110 = vrot.slane %v105, %v109
  %v111 = vlaneseq
  %v112 = vshrl.u32 %v111, 7
  %v113 = vsub.s32 1, %v112
  %v114 = vrot.slane %v105, %v113
  %s117 = scalar_lea.vmem %s0, 480
  %v118 = vld [vmem:[%s117] ss:$8 sm:$0x3]
  %v120 = vlaneseq
  %v121 = vshrl.u32 %v120, 7
  %v122 = vsub.s32 0, %v121
  %v123 = vrot.slane %v118, %v122
  %v124 = vlaneseq
  %v125 = vshrl.u32 %v124, 7
  %v126 = vsub.s32 1, %v125
  %v127 = vrot.slane %v118, %v126
  %v130 = vmul.f32 %v31, %v71
  %v131 = vmul.f32 %v32, %v75
  %v132 = vmul.f32 %v130, 0.5477226
  %v133 = vmul.f32 %v131, 0.5477226
  %v134 = vmul.f32 %v31, %v84
  %v135 = vmul.f32 %v32, %v88
  %v136 = vmul.f32 %v134, 0.5477226
  %v137 = vmul.f32 %v135, 0.5477226
  %v138 = vmul.f32 %v31, %v97
  %v139 = vmul.f32 %v32, %v101
  %v140 = vmul.f32 %v138, -0.31622776
  %v141 = vmul.f32 %v139, -0.31622776
  %v142 = vmul.f32 %v31, %v123
  %v143 = vmul.f32 %v32, %v127
  %v144 = vmul.f32 %v142, -0.5477226
  %v145 = vmul.f32 %v143, -0.5477226
  %v146 = vadd.f32 %v140, %v144
  %v147 = vadd.f32 %v141, %v145
  %v148 = vmul.f32 %v33, %v84
  %v149 = vmul.f32 %v34, %v88
  %v150 = vmul.f32 %v148, 0.5477226
  %v151 = vmul.f32 %v149, 0.5477226
  %v152 = vadd.f32 %v146, %v150
  %v153 = vadd.f32 %v147, %v151
  %v154 = vmul.f32 %v33, %v97
  %v155 = vmul.f32 %v34, %v101
  %v156 = vmul.f32 %v154, 0.6324555
  %v157 = vmul.f32 %v155, 0.6324555
  %v158 = vadd.f32 %v136, %v156
  %v159 = vadd.f32 %v137, %v157
  %v160 = vmul.f32 %v33, %v110
  %v161 = vmul.f32 %v34, %v114
  %v162 = vmul.f32 %v160, 0.5477226
  %v163 = vmul.f32 %v161, 0.5477226
  %v164 = vadd.f32 %v132, %v162
  %v165 = vadd.f32 %v133, %v163
  %v166 = vmul.f32 %v35, %v71
  %v167 = vmul.f32 %v36, %v75
  %v168 = vmul.f32 %v166, 0.5477226
  %v169 = vmul.f32 %v167, 0.5477226
  %v170 = vadd.f32 %v152, %v168
  %v171 = vadd.f32 %v153, %v169
  %v172 = vmul.f32 %v35, %v97
  %v173 = vmul.f32 %v36, %v101
  %v174 = vmul.f32 %v172, -0.31622776
  %v175 = vmul.f32 %v173, -0.31622776
  %v176 = vadd.f32 %v164, %v174
  %v177 = vadd.f32 %v165, %v175
  %v178 = vmul.f32 %v35, %v110
  %v179 = vmul.f32 %v36, %v114
  %v180 = vmul.f32 %v178, 0.5477226
  %v181 = vmul.f32 %v179, 0.5477226
  %v182 = vadd.f32 %v158, %v180
  %v183 = vadd.f32 %v159, %v181
  %v184 = vmul.f32 %v35, %v123
  %v185 = vmul.f32 %v36, %v127
  %v186 = vmul.f32 %v184, 0.5477226
  %v187 = vmul.f32 %v185, 0.5477226
  %v188 = vadd.f32 %v176, %v186
  %v189 = vadd.f32 %v177, %v187
  %v190 = vmul.f32 %v63, %v170
  %v191 = vmul.f32 %v64, %v171
  %v192 = vadd.f32 %v57, %v190
  %v193 = vadd.f32 %v58, %v191
  %v194 = vmul.f32 %v63, %v182
  %v195 = vmul.f32 %v64, %v183
  %v196 = vadd.f32 %v59, %v194
  %v197 = vadd.f32 %v60, %v195
  %v198 = vmul.f32 %v63, %v188
  %v199 = vmul.f32 %v64, %v189
  %v200 = vadd.f32 %v61, %v198
  %v201 = vadd.f32 %v62, %v199
  %202 = vst [vmem:[%s1 + $0x20] sm:$0xff] %v192
  %203 = vst [vmem:[%s1 + $0x28] sm:$0xff] %v193
  %204 = vst [vmem:[%s1 + $0x40] sm:$0xff] %v196
  %205 = vst [vmem:[%s1 + $0x48] sm:$0xff] %v197
  %206 = vst [vmem:[%s1 + $0x60] sm:$0xff] %v200
  %207 = vst [vmem:[%s1 + $0x68] sm:$0xff] %v201
  %v208 = vld [vmem:[%s0 + $0x80] sm:$0xff]
  %v209 = vld [vmem:[%s0 + $0x88] sm:$0xff]
  %v210 = vld [vmem:[%s0 + $0xa0] sm:$0xff]
  %v211 = vld [vmem:[%s0 + $0xa8] sm:$0xff]
  %v212 = vld [vmem:[%s0 + $0xc0] sm:$0xff]
  %v213 = vld [vmem:[%s0 + $0xc8] sm:$0xff]
  %v214 = vld [vmem:[%s0 + $0xe0] sm:$0xff]
  %v215 = vld [vmem:[%s0 + $0xe8] sm:$0xff]
  %v216 = vld [vmem:[%s0 + $0x100] sm:$0xff]
  %v217 = vld [vmem:[%s0 + $0x108] sm:$0xff]
  %v218 = vld [vmem:[%s0 + $0x180] sm:$0xff]
  %v219 = vld [vmem:[%s0 + $0x188] sm:$0xff]
  %v220 = vld [vmem:[%s12] ss:$8 sm:$0x3]
  %v222 = vlaneseq
  %v223 = vshrl.u32 %v222, 7
  %v224 = vsub.s32 0, %v223
  %v225 = vrot.slane %v220, %v224
  %v226 = vlaneseq
  %v227 = vshrl.u32 %v226, 7
  %v228 = vsub.s32 1, %v227
  %v229 = vrot.slane %v220, %v228
  %v232 = vmul.f32 %v208, %v225
  %v233 = vmul.f32 %v209, %v229
  %v234 = vmul.f32 %v210, %v225
  %v235 = vmul.f32 %v211, %v229
  %v236 = vmul.f32 %v212, %v225
  %v237 = vmul.f32 %v213, %v229
  %v238 = vmul.f32 %v214, %v225
  %v239 = vmul.f32 %v215, %v229
  %v240 = vmul.f32 %v216, %v225
  %v241 = vmul.f32 %v217, %v229
  %v242 = vmul.f32 %v218, %v232
  %v243 = vmul.f32 %v219, %v233
  %v244 = vmul.f32 %v218, %v234
  %v245 = vmul.f32 %v219, %v235
  %v246 = vmul.f32 %v218, %v236
  %v247 = vmul.f32 %v219, %v237
  %v248 = vmul.f32 %v218, %v238
  %v249 = vmul.f32 %v219, %v239
  %v250 = vmul.f32 %v218, %v240
  %v251 = vmul.f32 %v219, %v241
  %v252 = vld [vmem:[%s0 + $0x1a0] sm:$0xff]
  %v253 = vld [vmem:[%s0 + $0x1a8] sm:$0xff]
  %v254 = vld [vmem:[%s65] ss:$8 sm:$0x3]
  %v256 = vlaneseq
  %v257 = vshrl.u32 %v256, 7
  %v258 = vsub.s32 0, %v257
  %v259 = vrot.slane %v254, %v258
  %v260 = vlaneseq
  %v261 = vshrl.u32 %v260, 7
  %v262 = vsub.s32 1, %v261
  %v263 = vrot.slane %v254, %v262
  %v266 = vld [vmem:[%s78] ss:$8 sm:$0x3]
  %v268 = vlaneseq
  %v269 = vshrl.u32 %v268, 7
  %v270 = vsub.s32 0, %v269
  %v271 = vrot.slane %v266, %v270
  %v272 = vlaneseq
  %v273 = vshrl.u32 %v272, 7
  %v274 = vsub.s32 1, %v273
  %v275 = vrot.slane %v266, %v274
  %v278 = vld [vmem:[%s91] ss:$8 sm:$0x3]
  %v280 = vlaneseq
  %v281 = vshrl.u32 %v280, 7
  %v282 = vsub.s32 0, %v281
  %v283 = vrot.slane %v278, %v282
  %v284 = vlaneseq
  %v285 = vshrl.u32 %v284, 7
  %v286 = vsub.s32 1, %v285
  %v287 = vrot.slane %v278, %v286
  %v290 = vld [vmem:[%s104] ss:$8 sm:$0x3]
  %v292 = vlaneseq
  %v293 = vshrl.u32 %v292, 7
  %v294 = vsub.s32 0, %v293
  %v295 = vrot.slane %v290, %v294
  %v296 = vlaneseq
  %v297 = vshrl.u32 %v296, 7
  %v298 = vsub.s32 1, %v297
  %v299 = vrot.slane %v290, %v298
  %v302 = vld [vmem:[%s117] ss:$8 sm:$0x3]
  %v304 = vlaneseq
  %v305 = vshrl.u32 %v304, 7
  %v306 = vsub.s32 0, %v305
  %v307 = vrot.slane %v302, %v306
  %v308 = vlaneseq
  %v309 = vshrl.u32 %v308, 7
  %v310 = vsub.s32 1, %v309
  %v311 = vrot.slane %v302, %v310
  %v314 = vmul.f32 %v208, %v259
  %v315 = vmul.f32 %v209, %v263
  %v316 = vmul.f32 %v314, -0.5345225
  %v317 = vmul.f32 %v315, -0.5345225
  %v318 = vmul.f32 %v208, %v271
  %v319 = vmul.f32 %v209, %v275
  %v320 = vmul.f32 %v318, 0.46291006
  %v321 = vmul.f32 %v319, 0.46291006
  %v322 = vmul.f32 %v208, %v283
  %v323 = vmul.f32 %v209, %v287
  %v324 = vmul.f32 %v322, -0.5345225
  %v325 = vmul.f32 %v323, -0.5345225
  %v326 = vmul.f32 %v208, %v295
  %v327 = vmul.f32 %v209, %v299
  %v328 = vmul.f32 %v326, 0.46291006
  %v329 = vmul.f32 %v327, 0.46291006
  %v330 = vmul.f32 %v210, %v259
  %v331 = vmul.f32 %v211, %v263
  %v332 = vmul.f32 %v330, 0.46291006
  %v333 = vmul.f32 %v331, 0.46291006
  %v334 = vadd.f32 %v320, %v332
  %v335 = vadd.f32 %v321, %v333
  %v336 = vmul.f32 %v210, %v271
  %v337 = vmul.f32 %v211, %v275
  %v338 = vmul.f32 %v336, 0.26726124
  %v339 = vmul.f32 %v337, 0.26726124
  %v340 = vadd.f32 %v316, %v338
  %v341 = vadd.f32 %v317, %v339
  %v342 = vmul.f32 %v336, -0.46291006
  %v343 = vmul.f32 %v337, -0.46291006
  %v344 = vmul.f32 %v210, %v283
  %v345 = vmul.f32 %v211, %v287
  %v346 = vmul.f32 %v344, 0.26726124
  %v347 = vmul.f32 %v345, 0.26726124
  %v348 = vadd.f32 %v328, %v346
  %v349 = vadd.f32 %v329, %v347
  %v350 = vmul.f32 %v210, %v295
  %v351 = vmul.f32 %v211, %v299
  %v352 = vmul.f32 %v350, 0.46291006
  %v353 = vmul.f32 %v351, 0.46291006
  %v354 = vadd.f32 %v324, %v352
  %v355 = vadd.f32 %v325, %v353
  %v356 = vmul.f32 %v210, %v307
  %v357 = vmul.f32 %v211, %v311
  %v358 = vmul.f32 %v356, -0.46291006
  %v359 = vmul.f32 %v357, -0.46291006
  %v360 = vadd.f32 %v348, %v358
  %v361 = vadd.f32 %v349, %v359
  %v362 = vmul.f32 %v212, %v259
  %v363 = vmul.f32 %v213, %v263
  %v364 = vmul.f32 %v362, -0.5345225
  %v365 = vmul.f32 %v363, -0.5345225
  %v366 = vadd.f32 %v354, %v364
  %v367 = vadd.f32 %v355, %v365
  %v368 = vmul.f32 %v212, %v271
  %v369 = vmul.f32 %v213, %v275
  %v370 = vmul.f32 %v368, 0.26726124
  %v371 = vmul.f32 %v369, 0.26726124
  %v372 = vadd.f32 %v360, %v370
  %v373 = vadd.f32 %v361, %v371
  %v374 = vmul.f32 %v212, %v283
  %v375 = vmul.f32 %v213, %v287
  %v376 = vmul.f32 %v374, 0.5345225
  %v377 = vmul.f32 %v375, 0.5345225
  %v378 = vadd.f32 %v340, %v376
  %v379 = vadd.f32 %v341, %v377
  %v380 = vmul.f32 %v212, %v295
  %v381 = vmul.f32 %v213, %v299
  %v382 = vmul.f32 %v380, 0.26726124
  %v383 = vmul.f32 %v381, 0.26726124
  %v384 = vadd.f32 %v334, %v382
  %v385 = vadd.f32 %v335, %v383
  %v386 = vmul.f32 %v212, %v307
  %v387 = vmul.f32 %v213, %v311
  %v388 = vmul.f32 %v386, -0.5345225
  %v389 = vmul.f32 %v387, -0.5345225
  %v390 = vadd.f32 %v342, %v388
  %v391 = vadd.f32 %v343, %v389
  %v392 = vmul.f32 %v214, %v259
  %v393 = vmul.f32 %v215, %v263
  %v394 = vmul.f32 %v392, 0.46291006
  %v395 = vmul.f32 %v393, 0.46291006
  %v396 = vadd.f32 %v372, %v394
  %v397 = vadd.f32 %v373, %v395
  %v398 = vmul.f32 %v214, %v271
  %v399 = vmul.f32 %v215, %v275
  %v400 = vmul.f32 %v398, 0.46291006
  %v401 = vmul.f32 %v399, 0.46291006
  %v402 = vadd.f32 %v366, %v400
  %v403 = vadd.f32 %v367, %v401
  %v404 = vmul.f32 %v214, %v283
  %v405 = vmul.f32 %v215, %v287
  %v406 = vmul.f32 %v404, 0.26726124
  %v407 = vmul.f32 %v405, 0.26726124
  %v408 = vadd.f32 %v384, %v406
  %v409 = vadd.f32 %v385, %v407
  %v410 = vmul.f32 %v214, %v295
  %v411 = vmul.f32 %v215, %v299
  %v412 = vmul.f32 %v410, 0.26726124
  %v413 = vmul.f32 %v411, 0.26726124
  %v414 = vadd.f32 %v378, %v412
  %v415 = vadd.f32 %v379, %v413
  %v416 = vmul.f32 %v410, 0.46291006
  %v417 = vmul.f32 %v411, 0.46291006
  %v418 = vadd.f32 %v390, %v416
  %v419 = vadd.f32 %v391, %v417
  %v420 = vmul.f32 %v214, %v307
  %v421 = vmul.f32 %v215, %v311
  %v422 = vmul.f32 %v420, 0.46291006
  %v423 = vmul.f32 %v421, 0.46291006
  %v424 = vadd.f32 %v408, %v422
  %v425 = vadd.f32 %v409, %v423
  %v426 = vmul.f32 %v216, %v271
  %v427 = vmul.f32 %v217, %v275
  %v428 = vmul.f32 %v426, -0.46291006
  %v429 = vmul.f32 %v427, -0.46291006
  %v430 = vadd.f32 %v396, %v428
  %v431 = vadd.f32 %v397, %v429
  %v432 = vmul.f32 %v216, %v283
  %v433 = vmul.f32 %v217, %v287
  %v434 = vmul.f32 %v432, -0.5345225
  %v435 = vmul.f32 %v433, -0.5345225
  %v436 = vadd.f32 %v418, %v434
  %v437 = vadd.f32 %v419, %v435
  %v438 = vmul.f32 %v216, %v295
  %v439 = vmul.f32 %v217, %v299
  %v440 = vmul.f32 %v438, 0.46291006
  %v441 = vmul.f32 %v439, 0.46291006
  %v442 = vadd.f32 %v424, %v440
  %v443 = vadd.f32 %v425, %v441
  %v444 = vmul.f32 %v216, %v307
  %v445 = vmul.f32 %v217, %v311
  %v446 = vmul.f32 %v444, -0.5345225
  %v447 = vmul.f32 %v445, -0.5345225
  %v448 = vadd.f32 %v414, %v446
  %v449 = vadd.f32 %v415, %v447
  %v450 = vmul.f32 %v252, %v402
  %v451 = vmul.f32 %v253, %v403
  %v452 = vadd.f32 %v242, %v450
  %v453 = vadd.f32 %v243, %v451
  %v454 = vmul.f32 %v252, %v430
  %v455 = vmul.f32 %v253, %v431
  %v456 = vadd.f32 %v244, %v454
  %v457 = vadd.f32 %v245, %v455
  %v458 = vmul.f32 %v252, %v448
  %v459 = vmul.f32 %v253, %v449
  %v460 = vadd.f32 %v246, %v458
  %v461 = vadd.f32 %v247, %v459
  %v462 = vmul.f32 %v252, %v442
  %v463 = vmul.f32 %v253, %v443
  %v464 = vadd.f32 %v248, %v462
  %v465 = vadd.f32 %v249, %v463
  %v466 = vmul.f32 %v252, %v436
  %v467 = vmul.f32 %v253, %v437
  %v468 = vadd.f32 %v250, %v466
  %v469 = vadd.f32 %v251, %v467
  %470 = vst [vmem:[%s1 + $0x80] sm:$0xff] %v452
  %471 = vst [vmem:[%s1 + $0x88] sm:$0xff] %v453
  %472 = vst [vmem:[%s1 + $0xa0] sm:$0xff] %v456
  %473 = vst [vmem:[%s1 + $0xa8] sm:$0xff] %v457
  %474 = vst [vmem:[%s1 + $0xc0] sm:$0xff] %v460
  %475 = vst [vmem:[%s1 + $0xc8] sm:$0xff] %v461
  %476 = vst [vmem:[%s1 + $0xe0] sm:$0xff] %v464
  %477 = vst [vmem:[%s1 + $0xe8] sm:$0xff] %v465
  %478 = vst [vmem:[%s1 + $0x100] sm:$0xff] %v468
  %479 = vst [vmem:[%s1 + $0x108] sm:$0xff] %v469
  %s480 = scalar_lea.vmem %s0, 16
  %v481 = vld [vmem:[%s480] sm:$0xff]
  %v482 = vld [vmem:[%s480 + $0x8] sm:$0xff]
  %v483 = vld [vmem:[%s480 + $0x120] sm:$0xff]
  %v484 = vld [vmem:[%s480 + $0x128] sm:$0xff]
  %s485 = scalar_lea.vmem %s480, 448
  %v486 = vld [vmem:[%s485] ss:$8 sm:$0x3]
  %v488 = vlaneseq
  %v489 = vshrl.u32 %v488, 7
  %v490 = vsub.s32 0, %v489
  %v491 = vrot.slane %v486, %v490
  %v492 = vlaneseq
  %v493 = vshrl.u32 %v492, 7
  %v494 = vsub.s32 1, %v493
  %v495 = vrot.slane %v486, %v494
  %v498 = vmul.f32 %v481, %v491
  %v499 = vmul.f32 %v482, %v495
  %v500 = vmul.f32 %v483, %v498
  %v501 = vmul.f32 %v484, %v499
  %s502 = scalar_lea.vmem %s1, 16
  %503 = vst [vmem:[%s502] sm:$0xff] %v500
  %504 = vst [vmem:[%s502 + $0x8] sm:$0xff] %v501
  %v505 = vld [vmem:[%s480 + $0x20] sm:$0xff]
  %v506 = vld [vmem:[%s480 + $0x28] sm:$0xff]
  %v507 = vld [vmem:[%s480 + $0x40] sm:$0xff]
  %v508 = vld [vmem:[%s480 + $0x48] sm:$0xff]
  %v509 = vld [vmem:[%s480 + $0x60] sm:$0xff]
  %v510 = vld [vmem:[%s480 + $0x68] sm:$0xff]
  %v511 = vld [vmem:[%s480 + $0x140] sm:$0xff]
  %v512 = vld [vmem:[%s480 + $0x148] sm:$0xff]
  %v513 = vld [vmem:[%s485] ss:$8 sm:$0x3]
  %v515 = vlaneseq
  %v516 = vshrl.u32 %v515, 7
  %v517 = vsub.s32 0, %v516
  %v518 = vrot.slane %v513, %v517
  %v519 = vlaneseq
  %v520 = vshrl.u32 %v519, 7
  %v521 = vsub.s32 1, %v520
  %v522 = vrot.slane %v513, %v521
  %v525 = vmul.f32 %v505, %v518
  %v526 = vmul.f32 %v506, %v522
  %v527 = vmul.f32 %v507, %v518
  %v528 = vmul.f32 %v508, %v522
  %v529 = vmul.f32 %v509, %v518
  %v530 = vmul.f32 %v510, %v522
  %v531 = vmul.f32 %v511, %v525
  %v532 = vmul.f32 %v512, %v526
  %v533 = vmul.f32 %v511, %v527
  %v534 = vmul.f32 %v512, %v528
  %v535 = vmul.f32 %v511, %v529
  %v536 = vmul.f32 %v512, %v530
  %v537 = vld [vmem:[%s480 + $0x160] sm:$0xff]
  %v538 = vld [vmem:[%s480 + $0x168] sm:$0xff]
  %s539 = scalar_lea.vmem %s480, 452
  %v540 = vld [vmem:[%s539] ss:$8 sm:$0x3]
  %v542 = vlaneseq
  %v543 = vshrl.u32 %v542, 7
  %v544 = vsub.s32 0, %v543
  %v545 = vrot.slane %v540, %v544
  %v546 = vlaneseq
  %v547 = vshrl.u32 %v546, 7
  %v548 = vsub.s32 1, %v547
  %v549 = vrot.slane %v540, %v548
  %s552 = scalar_lea.vmem %s480, 453
  %v553 = vld [vmem:[%s552] ss:$8 sm:$0x3]
  %v555 = vlaneseq
  %v556 = vshrl.u32 %v555, 7
  %v557 = vsub.s32 0, %v556
  %v558 = vrot.slane %v553, %v557
  %v559 = vlaneseq
  %v560 = vshrl.u32 %v559, 7
  %v561 = vsub.s32 1, %v560
  %v562 = vrot.slane %v553, %v561
  %s565 = scalar_lea.vmem %s480, 454
  %v566 = vld [vmem:[%s565] ss:$8 sm:$0x3]
  %v568 = vlaneseq
  %v569 = vshrl.u32 %v568, 7
  %v570 = vsub.s32 0, %v569
  %v571 = vrot.slane %v566, %v570
  %v572 = vlaneseq
  %v573 = vshrl.u32 %v572, 7
  %v574 = vsub.s32 1, %v573
  %v575 = vrot.slane %v566, %v574
  %s578 = scalar_lea.vmem %s480, 455
  %v579 = vld [vmem:[%s578] ss:$8 sm:$0x3]
  %v581 = vlaneseq
  %v582 = vshrl.u32 %v581, 7
  %v583 = vsub.s32 0, %v582
  %v584 = vrot.slane %v579, %v583
  %v585 = vlaneseq
  %v586 = vshrl.u32 %v585, 7
  %v587 = vsub.s32 1, %v586
  %v588 = vrot.slane %v579, %v587
  %s591 = scalar_lea.vmem %s480, 480
  %v592 = vld [vmem:[%s591] ss:$8 sm:$0x3]
  %v594 = vlaneseq
  %v595 = vshrl.u32 %v594, 7
  %v596 = vsub.s32 0, %v595
  %v597 = vrot.slane %v592, %v596
  %v598 = vlaneseq
  %v599 = vshrl.u32 %v598, 7
  %v600 = vsub.s32 1, %v599
  %v601 = vrot.slane %v592, %v600
  %v604 = vmul.f32 %v505, %v545
  %v605 = vmul.f32 %v506, %v549
  %v606 = vmul.f32 %v604, 0.5477226
  %v607 = vmul.f32 %v605, 0.5477226
  %v608 = vmul.f32 %v505, %v558
  %v609 = vmul.f32 %v506, %v562
  %v610 = vmul.f32 %v608, 0.5477226
  %v611 = vmul.f32 %v609, 0.5477226
  %v612 = vmul.f32 %v505, %v571
  %v613 = vmul.f32 %v506, %v575
  %v614 = vmul.f32 %v612, -0.31622776
  %v615 = vmul.f32 %v613, -0.31622776
  %v616 = vmul.f32 %v505, %v597
  %v617 = vmul.f32 %v506, %v601
  %v618 = vmul.f32 %v616, -0.5477226
  %v619 = vmul.f32 %v617, -0.5477226
  %v620 = vadd.f32 %v614, %v618
  %v621 = vadd.f32 %v615, %v619
  %v622 = vmul.f32 %v507, %v558
  %v623 = vmul.f32 %v508, %v562
  %v624 = vmul.f32 %v622, 0.5477226
  %v625 = vmul.f32 %v623, 0.5477226
  %v626 = vadd.f32 %v620, %v624
  %v627 = vadd.f32 %v621, %v625
  %v628 = vmul.f32 %v507, %v571
  %v629 = vmul.f32 %v508, %v575
  %v630 = vmul.f32 %v628, 0.6324555
  %v631 = vmul.f32 %v629, 0.6324555
  %v632 = vadd.f32 %v610, %v630
  %v633 = vadd.f32 %v611, %v631
  %v634 = vmul.f32 %v507, %v584
  %v635 = vmul.f32 %v508, %v588
  %v636 = vmul.f32 %v634, 0.5477226
  %v637 = vmul.f32 %v635, 0.5477226
  %v638 = vadd.f32 %v606, %v636
  %v639 = vadd.f32 %v607, %v637
  %v640 = vmul.f32 %v509, %v545
  %v641 = vmul.f32 %v510, %v549
  %v642 = vmul.f32 %v640, 0.5477226
  %v643 = vmul.f32 %v641, 0.5477226
  %v644 = vadd.f32 %v626, %v642
  %v645 = vadd.f32 %v627, %v643
  %v646 = vmul.f32 %v509, %v571
  %v647 = vmul.f32 %v510, %v575
  %v648 = vmul.f32 %v646, -0.31622776
  %v649 = vmul.f32 %v647, -0.31622776
  %v650 = vadd.f32 %v638, %v648
  %v651 = vadd.f32 %v639, %v649
  %v652 = vmul.f32 %v509, %v584
  %v653 = vmul.f32 %v510, %v588
  %v654 = vmul.f32 %v652, 0.5477226
  %v655 = vmul.f32 %v653, 0.5477226
  %v656 = vadd.f32 %v632, %v654
  %v657 = vadd.f32 %v633, %v655
  %v658 = vmul.f32 %v509, %v597
  %v659 = vmul.f32 %v510, %v601
  %v660 = vmul.f32 %v658, 0.5477226
  %v661 = vmul.f32 %v659, 0.5477226
  %v662 = vadd.f32 %v650, %v660
  %v663 = vadd.f32 %v651, %v661
  %v664 = vmul.f32 %v537, %v644
  %v665 = vmul.f32 %v538, %v645
  %v666 = vadd.f32 %v531, %v664
  %v667 = vadd.f32 %v532, %v665
  %v668 = vmul.f32 %v537, %v656
  %v669 = vmul.f32 %v538, %v657
  %v670 = vadd.f32 %v533, %v668
  %v671 = vadd.f32 %v534, %v669
  %v672 = vmul.f32 %v537, %v662
  %v673 = vmul.f32 %v538, %v663
  %v674 = vadd.f32 %v535, %v672
  %v675 = vadd.f32 %v536, %v673
  %676 = vst [vmem:[%s502 + $0x20] sm:$0xff] %v666
  %677 = vst [vmem:[%s502 + $0x28] sm:$0xff] %v667
  %678 = vst [vmem:[%s502 + $0x40] sm:$0xff] %v670
  %679 = vst [vmem:[%s502 + $0x48] sm:$0xff] %v671
  %680 = vst [vmem:[%s502 + $0x60] sm:$0xff] %v674
  %681 = vst [vmem:[%s502 + $0x68] sm:$0xff] %v675
  %v682 = vld [vmem:[%s480 + $0x80] sm:$0xff]
  %v683 = vld [vmem:[%s480 + $0x88] sm:$0xff]
  %v684 = vld [vmem:[%s480 + $0xa0] sm:$0xff]
  %v685 = vld [vmem:[%s480 + $0xa8] sm:$0xff]
  %v686 = vld [vmem:[%s480 + $0xc0] sm:$0xff]
  %v687 = vld [vmem:[%s480 + $0xc8] sm:$0xff]
  %v688 = vld [vmem:[%s480 + $0xe0] sm:$0xff]
  %v689 = vld [vmem:[%s480 + $0xe8] sm:$0xff]
  %v690 = vld [vmem:[%s480 + $0x100] sm:$0xff]
  %v691 = vld [vmem:[%s480 + $0x108] sm:$0xff]
  %v692 = vld [vmem:[%s480 + $0x180] sm:$0xff]
  %v693 = vld [vmem:[%s480 + $0x188] sm:$0xff]
  %v694 = vld [vmem:[%s485] ss:$8 sm:$0x3]
  %v696 = vlaneseq
  %v697 = vshrl.u32 %v696, 7
  %v698 = vsub.s32 0, %v697
  %v699 = vrot.slane %v694, %v698
  %v700 = vlaneseq
  %v701 = vshrl.u32 %v700, 7
  %v702 = vsub.s32 1, %v701
  %v703 = vrot.slane %v694, %v702
  %v706 = vmul.f32 %v682, %v699
  %v707 = vmul.f32 %v683, %v703
  %v708 = vmul.f32 %v684, %v699
  %v709 = vmul.f32 %v685, %v703
  %v710 = vmul.f32 %v686, %v699
  %v711 = vmul.f32 %v687, %v703
  %v712 = vmul.f32 %v688, %v699
  %v713 = vmul.f32 %v689, %v703
  %v714 = vmul.f32 %v690, %v699
  %v715 = vmul.f32 %v691, %v703
  %v716 = vmul.f32 %v692, %v706
  %v717 = vmul.f32 %v693, %v707
  %v718 = vmul.f32 %v692, %v708
  %v719 = vmul.f32 %v693, %v709
  %v720 = vmul.f32 %v692, %v710
  %v721 = vmul.f32 %v693, %v711
  %v722 = vmul.f32 %v692, %v712
  %v723 = vmul.f32 %v693, %v713
  %v724 = vmul.f32 %v692, %v714
  %v725 = vmul.f32 %v693, %v715
  %v726 = vld [vmem:[%s480 + $0x1a0] sm:$0xff]
  %v727 = vld [vmem:[%s480 + $0x1a8] sm:$0xff]
  %v728 = vld [vmem:[%s539] ss:$8 sm:$0x3]
  %v730 = vlaneseq
  %v731 = vshrl.u32 %v730, 7
  %v732 = vsub.s32 0, %v731
  %v733 = vrot.slane %v728, %v732
  %v734 = vlaneseq
  %v735 = vshrl.u32 %v734, 7
  %v736 = vsub.s32 1, %v735
  %v737 = vrot.slane %v728, %v736
  %v740 = vld [vmem:[%s552] ss:$8 sm:$0x3]
  %v742 = vlaneseq
  %v743 = vshrl.u32 %v742, 7
  %v744 = vsub.s32 0, %v743
  %v745 = vrot.slane %v740, %v744
  %v746 = vlaneseq
  %v747 = vshrl.u32 %v746, 7
  %v748 = vsub.s32 1, %v747
  %v749 = vrot.slane %v740, %v748
  %v752 = vld [vmem:[%s565] ss:$8 sm:$0x3]
  %v754 = vlaneseq
  %v755 = vshrl.u32 %v754, 7
  %v756 = vsub.s32 0, %v755
  %v757 = vrot.slane %v752, %v756
  %v758 = vlaneseq
  %v759 = vshrl.u32 %v758, 7
  %v760 = vsub.s32 1, %v759
  %v761 = vrot.slane %v752, %v760
  %v764 = vld [vmem:[%s578] ss:$8 sm:$0x3]
  %v766 = vlaneseq
  %v767 = vshrl.u32 %v766, 7
  %v768 = vsub.s32 0, %v767
  %v769 = vrot.slane %v764, %v768
  %v770 = vlaneseq
  %v771 = vshrl.u32 %v770, 7
  %v772 = vsub.s32 1, %v771
  %v773 = vrot.slane %v764, %v772
  %v776 = vld [vmem:[%s591] ss:$8 sm:$0x3]
  %v778 = vlaneseq
  %v779 = vshrl.u32 %v778, 7
  %v780 = vsub.s32 0, %v779
  %v781 = vrot.slane %v776, %v780
  %v782 = vlaneseq
  %v783 = vshrl.u32 %v782, 7
  %v784 = vsub.s32 1, %v783
  %v785 = vrot.slane %v776, %v784
  %v788 = vmul.f32 %v682, %v733
  %v789 = vmul.f32 %v683, %v737
  %v790 = vmul.f32 %v788, -0.5345225
  %v791 = vmul.f32 %v789, -0.5345225
  %v792 = vmul.f32 %v682, %v745
  %v793 = vmul.f32 %v683, %v749
  %v794 = vmul.f32 %v792, 0.46291006
  %v795 = vmul.f32 %v793, 0.46291006
  %v796 = vmul.f32 %v682, %v757
  %v797 = vmul.f32 %v683, %v761
  %v798 = vmul.f32 %v796, -0.5345225
  %v799 = vmul.f32 %v797, -0.5345225
  %v800 = vmul.f32 %v682, %v769
  %v801 = vmul.f32 %v683, %v773
  %v802 = vmul.f32 %v800, 0.46291006
  %v803 = vmul.f32 %v801, 0.46291006
  %v804 = vmul.f32 %v684, %v733
  %v805 = vmul.f32 %v685, %v737
  %v806 = vmul.f32 %v804, 0.46291006
  %v807 = vmul.f32 %v805, 0.46291006
  %v808 = vadd.f32 %v794, %v806
  %v809 = vadd.f32 %v795, %v807
  %v810 = vmul.f32 %v684, %v745
  %v811 = vmul.f32 %v685, %v749
  %v812 = vmul.f32 %v810, 0.26726124
  %v813 = vmul.f32 %v811, 0.26726124
  %v814 = vadd.f32 %v790, %v812
  %v815 = vadd.f32 %v791, %v813
  %v816 = vmul.f32 %v810, -0.46291006
  %v817 = vmul.f32 %v811, -0.46291006
  %v818 = vmul.f32 %v684, %v757
  %v819 = vmul.f32 %v685, %v761
  %v820 = vmul.f32 %v818, 0.26726124
  %v821 = vmul.f32 %v819, 0.26726124
  %v822 = vadd.f32 %v802, %v820
  %v823 = vadd.f32 %v803, %v821
  %v824 = vmul.f32 %v684, %v769
  %v825 = vmul.f32 %v685, %v773
  %v826 = vmul.f32 %v824, 0.46291006
  %v827 = vmul.f32 %v825, 0.46291006
  %v828 = vadd.f32 %v798, %v826
  %v829 = vadd.f32 %v799, %v827
  %v830 = vmul.f32 %v684, %v781
  %v831 = vmul.f32 %v685, %v785
  %v832 = vmul.f32 %v830, -0.46291006
  %v833 = vmul.f32 %v831, -0.46291006
  %v834 = vadd.f32 %v822, %v832
  %v835 = vadd.f32 %v823, %v833
  %v836 = vmul.f32 %v686, %v733
  %v837 = vmul.f32 %v687, %v737
  %v838 = vmul.f32 %v836, -0.5345225
  %v839 = vmul.f32 %v837, -0.5345225
  %v840 = vadd.f32 %v828, %v838
  %v841 = vadd.f32 %v829, %v839
  %v842 = vmul.f32 %v686, %v745
  %v843 = vmul.f32 %v687, %v749
  %v844 = vmul.f32 %v842, 0.26726124
  %v845 = vmul.f32 %v843, 0.26726124
  %v846 = vadd.f32 %v834, %v844
  %v847 = vadd.f32 %v835, %v845
  %v848 = vmul.f32 %v686, %v757
  %v849 = vmul.f32 %v687, %v761
  %v850 = vmul.f32 %v848, 0.5345225
  %v851 = vmul.f32 %v849, 0.5345225
  %v852 = vadd.f32 %v814, %v850
  %v853 = vadd.f32 %v815, %v851
  %v854 = vmul.f32 %v686, %v769
  %v855 = vmul.f32 %v687, %v773
  %v856 = vmul.f32 %v854, 0.26726124
  %v857 = vmul.f32 %v855, 0.26726124
  %v858 = vadd.f32 %v808, %v856
  %v859 = vadd.f32 %v809, %v857
  %v860 = vmul.f32 %v686, %v781
  %v861 = vmul.f32 %v687, %v785
  %v862 = vmul.f32 %v860, -0.5345225
  %v863 = vmul.f32 %v861, -0.5345225
  %v864 = vadd.f32 %v816, %v862
  %v865 = vadd.f32 %v817, %v863
  %v866 = vmul.f32 %v688, %v733
  %v867 = vmul.f32 %v689, %v737
  %v868 = vmul.f32 %v866, 0.46291006
  %v869 = vmul.f32 %v867, 0.46291006
  %v870 = vadd.f32 %v846, %v868
  %v871 = vadd.f32 %v847, %v869
  %v872 = vmul.f32 %v688, %v745
  %v873 = vmul.f32 %v689, %v749
  %v874 = vmul.f32 %v872, 0.46291006
  %v875 = vmul.f32 %v873, 0.46291006
  %v876 = vadd.f32 %v840, %v874
  %v877 = vadd.f32 %v841, %v875
  %v878 = vmul.f32 %v688, %v757
  %v879 = vmul.f32 %v689, %v761
  %v880 = vmul.f32 %v878, 0.26726124
  %v881 = vmul.f32 %v879, 0.26726124
  %v882 = vadd.f32 %v858, %v880
  %v883 = vadd.f32 %v859, %v881
  %v884 = vmul.f32 %v688, %v769
  %v885 = vmul.f32 %v689, %v773
  %v886 = vmul.f32 %v884, 0.26726124
  %v887 = vmul.f32 %v885, 0.26726124
  %v888 = vadd.f32 %v852, %v886
  %v889 = vadd.f32 %v853, %v887
  %v890 = vmul.f32 %v884, 0.46291006
  %v891 = vmul.f32 %v885, 0.46291006
  %v892 = vadd.f32 %v864, %v890
  %v893 = vadd.f32 %v865, %v891
  %v894 = vmul.f32 %v688, %v781
  %v895 = vmul.f32 %v689, %v785
  %v896 = vmul.f32 %v894, 0.46291006
  %v897 = vmul.f32 %v895, 0.46291006
  %v898 = vadd.f32 %v882, %v896
  %v899 = vadd.f32 %v883, %v897
  %v900 = vmul.f32 %v690, %v745
  %v901 = vmul.f32 %v691, %v749
  %v902 = vmul.f32 %v900, -0.46291006
  %v903 = vmul.f32 %v901, -0.46291006
  %v904 = vadd.f32 %v870, %v902
  %v905 = vadd.f32 %v871, %v903
  %v906 = vmul.f32 %v690, %v757
  %v907 = vmul.f32 %v691, %v761
  %v908 = vmul.f32 %v906, -0.5345225
  %v909 = vmul.f32 %v907, -0.5345225
  %v910 = vadd.f32 %v892, %v908
  %v911 = vadd.f32 %v893, %v909
  %v912 = vmul.f32 %v690, %v769
  %v913 = vmul.f32 %v691, %v773
  %v914 = vmul.f32 %v912, 0.46291006
  %v915 = vmul.f32 %v913, 0.46291006
  %v916 = vadd.f32 %v898, %v914
  %v917 = vadd.f32 %v899, %v915
  %v918 = vmul.f32 %v690, %v781
  %v919 = vmul.f32 %v691, %v785
  %v920 = vmul.f32 %v918, -0.5345225
  %v921 = vmul.f32 %v919, -0.5345225
  %v922 = vadd.f32 %v888, %v920
  %v923 = vadd.f32 %v889, %v921
  %v924 = vmul.f32 %v726, %v876
  %v925 = vmul.f32 %v727, %v877
  %v926 = vadd.f32 %v716, %v924
  %v927 = vadd.f32 %v717, %v925
  %v928 = vmul.f32 %v726, %v904
  %v929 = vmul.f32 %v727, %v905
  %v930 = vadd.f32 %v718, %v928
  %v931 = vadd.f32 %v719, %v929
  %v932 = vmul.f32 %v726, %v922
  %v933 = vmul.f32 %v727, %v923
  %v934 = vadd.f32 %v720, %v932
  %v935 = vadd.f32 %v721, %v933
  %v936 = vmul.f32 %v726, %v916
  %v937 = vmul.f32 %v727, %v917
  %v938 = vadd.f32 %v722, %v936
  %v939 = vadd.f32 %v723, %v937
  %v940 = vmul.f32 %v726, %v910
  %v941 = vmul.f32 %v727, %v911
  %v942 = vadd.f32 %v724, %v940
  %v943 = vadd.f32 %v725, %v941
  %944 = vst [vmem:[%s502 + $0x80] sm:$0xff] %v926
  %945 = vst [vmem:[%s502 + $0x88] sm:$0xff] %v927
  %946 = vst [vmem:[%s502 + $0xa0] sm:$0xff] %v930
  %947 = vst [vmem:[%s502 + $0xa8] sm:$0xff] %v931
  %948 = vst [vmem:[%s502 + $0xc0] sm:$0xff] %v934
  %949 = vst [vmem:[%s502 + $0xc8] sm:$0xff] %v935
  %950 = vst [vmem:[%s502 + $0xe0] sm:$0xff] %v938
  %951 = vst [vmem:[%s502 + $0xe8] sm:$0xff] %v939
  %952 = vst [vmem:[%s502 + $0x100] sm:$0xff] %v942
  %953 = vst [vmem:[%s502 + $0x108] sm:$0xff] %v943
  // Predicated region
  $region6: #{depthwise_tensor_product.1} parent=0 // pred_check
    _
  $region7: #{depthwise_tensor_product.1} parent=0 // pred_check_branch
    %955 = sbr.rel (0) target = $region9
  $region8: #{depthwise_tensor_product.1} parent=0 // pred_region
    _
  $region9: #{depthwise_tensor_product.1} parent=0 // pred_fallthru
    _
  // Predicated region
  $region10: #{depthwise_tensor_product.1} parent=0 // pred_check
    _
  $region11: #{depthwise_tensor_product.1} parent=0 // pred_check_branch
    %957 = sbr.rel (0) target = $region13
  $region12: #{depthwise_tensor_product.1} parent=0 // pred_region
    _
  $region13: #{depthwise_tensor_product.1} parent=0 // pred_fallthru
    _

</llo_original>
